<compile_context>
chip_gen: v7x
topology: tpu7x:2x2x1
jax: 0.10.0
libtpu: 0.0.40
codegen_flags: <defaults>
</compile_context>

<pallas_src>
import jax
import jax.numpy as jnp
from jax.experimental import pallas as pl
from jax.experimental.pallas import tpu as pltpu

Z_PAD = 128  # each latent head padded to a full 128-lane vreg


def _round_up(x, m):
    return ((x + m - 1) // m) * m


# ---------------------------------------------------------------------------
# Fused Pallas kernel: encoder -> reparameterization -> decoder, all in VMEM
# ---------------------------------------------------------------------------

def _vae_fused_kernel(x_ref, eps_ref,
                      w_enc_ref, b_enc_ref,
                      w_lat_ref, b_lat_ref,
                      w_dec1_ref, b_dec1_ref,
                      w_dec2_ref, b_dec2_ref,
                      mu_ls_ref, out_ref):
    # --- encoder hidden: relu(x @ W_enc + b_enc)  (bf16 operands, f32 acc) ---
    h = jnp.dot(x_ref[...], w_enc_ref[...],
                preferred_element_type=jnp.float32) + b_enc_ref[...]
    h = jnp.maximum(h, 0.0)

    # --- fused latent heads: one lane-dense (hidden, 2*Z_PAD) matmul ---------
    y = jnp.dot(h.astype(jnp.bfloat16), w_lat_ref[...],
                preferred_element_type=jnp.float32) + b_lat_ref[...]
    mu_ls_ref[...] = y                               # lane-dense (TM, 256) store
    zp = y.shape[1] // 2                             # = 128, vreg-aligned split
    mu = y[:, :zp]
    log_sigma = y[:, zp:]

    # --- reparameterization: z = mu + exp(log_sigma) * eps (f32 epilogue) ----
    z = mu + jnp.exp(log_sigma) * eps_ref[...]

    # --- decoder: relu(z @ W1 + b1), sigmoid(hd @ W2 + b2) -------------------
    hd = jnp.dot(z.astype(jnp.bfloat16), w_dec1_ref[...],
                 preferred_element_type=jnp.float32) + b_dec1_ref[...]
    hd = jnp.maximum(hd, 0.0)
    logits = jnp.dot(hd.astype(jnp.bfloat16), w_dec2_ref[...],
                     preferred_element_type=jnp.float32) + b_dec2_ref[...]
    out_ref[...] = jax.nn.sigmoid(logits).astype(out_ref.dtype)


# ---------------------------------------------------------------------------
# Parameter construction + full VAE forward
# ---------------------------------------------------------------------------

def init_params(key, in_dim, hidden, z_dim):
    ks = jax.random.split(key, 5)
    scale = lambda fan_in: 1.0 / jnp.sqrt(jnp.float32(fan_in))
    f32, bf16 = jnp.float32, jnp.bfloat16

    # latent heads concatenated and padded to 128 lanes each
    w_mu = jax.random.normal(ks[1], (hidden, z_dim), f32) * scale(hidden)
    w_ls = jax.random.normal(ks[2], (hidden, z_dim), f32) * scale(hidden)
    w_lat = (jnp.zeros((hidden, 2 * Z_PAD), f32)
             .at[:, :z_dim].set(w_mu)
             .at[:, Z_PAD:Z_PAD + z_dim].set(w_ls))

    # decoder first layer padded to Z_PAD input lanes (rows z_dim.. are zero)
    w_dec1 = (jnp.zeros((Z_PAD, hidden), f32)
              .at[:z_dim].set(jax.random.normal(ks[3], (z_dim, hidden), f32)
                              * scale(z_dim)))

    return {
        "w_enc": (jax.random.normal(ks[0], (in_dim, hidden), f32)
                  * scale(in_dim)).astype(bf16),
        "b_enc": jnp.zeros((1, hidden), f32),
        "w_lat": w_lat.astype(bf16),
        "b_lat": jnp.zeros((1, 2 * Z_PAD), f32),
        "w_dec1": w_dec1.astype(bf16),
        "b_dec1": jnp.zeros((1, hidden), f32),
        "w_dec2": (jax.random.normal(ks[4], (hidden, in_dim), f32)
                   * scale(hidden)).astype(bf16),
        "b_dec2": jnp.zeros((1, in_dim), f32),
    }


def vae_forward(params, x_nchw, eps):
    """Returns (mu, log_sigma, out) exactly like the torch VAE.forward."""
    N, C, H, W = x_nchw.shape
    in_dim = C * H * W
    z_dim = eps.shape[1]
    hidden = params["w_enc"].shape[1]

    # bf16 input stream; pad batch only when required (multiple of 16 sublanes)
    x_flat = x_nchw.reshape(N, in_dim).astype(jnp.bfloat16)
    m16 = _round_up(N, 16)
    TM = min(512, m16)                       # >=256 rows at real batch sizes
    m_pad = _round_up(N, TM)
    x_p = x_flat if m_pad == N else jnp.pad(x_flat, ((0, m_pad - N), (0, 0)))
    eps_p = jnp.zeros((m_pad, Z_PAD), jnp.float32).at[:N, :z_dim].set(eps)

    grid = (m_pad // TM,)

    def row_spec(cols):                      # streamed, per-grid-step tiles
        return pl.BlockSpec((TM, cols), lambda i: (i, 0))

    def resident_spec(shape):                # weights/biases: VMEM-resident
        return pl.BlockSpec(shape, lambda i: (0, 0))

    # advisory cost hint for the XLA scheduler
    mm_flops = 2 * m_pad * (in_dim * hidden + hidden * 2 * Z_PAD
                            + Z_PAD * hidden + hidden * in_dim)
    weight_bytes = 2 * (in_dim * hidden + hidden * 2 * Z_PAD
                        + Z_PAD * hidden + hidden * in_dim) \
                   + 4 * (hidden + 2 * Z_PAD + hidden + in_dim)
    io_bytes = m_pad * (in_dim * 2 + Z_PAD * 4 + 2 * Z_PAD * 4 + in_dim * 2)
    cost = pl.CostEstimate(flops=int(mm_flops),
                           transcendentals=int(m_pad * (Z_PAD + in_dim)),
                           bytes_accessed=int(io_bytes + weight_bytes))

    mu_ls, out_flat = pl.pallas_call(
        _vae_fused_kernel,
        grid=grid,
        out_shape=(jax.ShapeDtypeStruct((m_pad, 2 * Z_PAD), jnp.float32),
                   jax.ShapeDtypeStruct((m_pad, in_dim), jnp.bfloat16)),
        in_specs=[
            row_spec(in_dim),                          # x (bf16)
            row_spec(Z_PAD),                           # eps (f32)
            resident_spec(params["w_enc"].shape),
            resident_spec(params["b_enc"].shape),
            resident_spec(params["w_lat"].shape),
            resident_spec(params["b_lat"].shape),
            resident_spec(params["w_dec1"].shape),
            resident_spec(params["b_dec1"].shape),
            resident_spec(params["w_dec2"].shape),
            resident_spec(params["b_dec2"].shape),
        ],
        out_specs=(row_spec(2 * Z_PAD), row_spec(in_dim)),
        compiler_params=pltpu.CompilerParams(
            dimension_semantics=("parallel",)),        # use both TCs on v7x
        cost_estimate=cost,
    )(x_p, eps_p,
      params["w_enc"], params["b_enc"],
      params["w_lat"], params["b_lat"],
      params["w_dec1"], params["b_dec1"],
      params["w_dec2"], params["b_dec2"])

    mu = mu_ls[:N, :z_dim]
    l_sigma = mu_ls[:N, Z_PAD:Z_PAD + z_dim]
    out = out_flat[:N].reshape(N, C, H, W)
    return mu, l_sigma, out


# ---------------------------------------------------------------------------
# Main
# ---------------------------------------------------------------------------

if __name__ == "__main__":
    N, C, H, W = 2, 4, 16, 16
    HIDDEN, Z_DIM = 256, 64
    in_dim = C * H * W

    key = jax.random.PRNGKey(0)
    k_x, k_eps, k_p = jax.random.split(key, 3)

    x = jax.random.normal(k_x, (N, C, H, W), jnp.float32)
    eps = jax.random.normal(k_eps, (N, Z_DIM), jnp.float32)  # deterministic reparam noise
    params = init_params(k_p, in_dim, HIDDEN, Z_DIM)

    mu, l_sigma, out = jax.jit(vae_forward)(params, x, eps)
    jax.block_until_ready((mu, l_sigma, out))

    assert mu.shape == (N, Z_DIM)
    assert l_sigma.shape == (N, Z_DIM)
    assert out.shape == (N, C, H, W)

    # plain-JAX reference with the same bf16-weight / f32-accumulate scheme
    x_flat = x.reshape(N, -1).astype(jnp.bfloat16)
    w_mu = params["w_lat"][:, :Z_DIM]
    w_ls = params["w_lat"][:, Z_PAD:Z_PAD + Z_DIM]
    b_mu = params["b_lat"][:, :Z_DIM]
    b_ls = params["b_lat"][:, Z_PAD:Z_PAD + Z_DIM]
    w_d1 = params["w_dec1"][:Z_DIM]

    h_ref = jnp.maximum(
        jnp.dot(x_flat, params["w_enc"],
                preferred_element_type=jnp.float32) + params["b_enc"], 0.0)
    h16 = h_ref.astype(jnp.bfloat16)
    mu_ref = jnp.dot(h16, w_mu, preferred_element_type=jnp.float32) + b_mu
    ls_ref = jnp.dot(h16, w_ls, preferred_element_type=jnp.float32) + b_ls
    z_ref = mu_ref + jnp.exp(ls_ref) * eps
    hd_ref = jnp.maximum(
        jnp.dot(z_ref.astype(jnp.bfloat16), w_d1,
                preferred_element_type=jnp.float32) + params["b_dec1"], 0.0)
    out_ref = jax.nn.sigmoid(
        jnp.dot(hd_ref.astype(jnp.bfloat16), params["w_dec2"],
                preferred_element_type=jnp.float32) + params["b_dec2"]
    ).reshape(N, C, H, W)

    assert jnp.allclose(mu, mu_ref, atol=1e-2, rtol=1e-2)
    assert jnp.allclose(l_sigma, ls_ref, atol=1e-2, rtol=1e-2)
    assert jnp.allclose(out.astype(jnp.float32), out_ref, atol=1e-2, rtol=1e-2)

    print("KERNEL_OK")
</pallas_src>

<mosaic_0001>
module attributes {stable_mosaic.version = 11 : i64} {
  func.func @_vae_fused_kernel(%arg0: i32, %arg1: memref<16x1024xbf16, #tpu.memory_space<vmem>>, %arg2: memref<16x128xf32, #tpu.memory_space<vmem>>, %arg3: memref<1024x256xbf16, #tpu.memory_space<vmem>>, %arg4: memref<1x256xf32, #tpu.memory_space<vmem>>, %arg5: memref<256x256xbf16, #tpu.memory_space<vmem>>, %arg6: memref<1x256xf32, #tpu.memory_space<vmem>>, %arg7: memref<128x256xbf16, #tpu.memory_space<vmem>>, %arg8: memref<1x256xf32, #tpu.memory_space<vmem>>, %arg9: memref<256x1024xbf16, #tpu.memory_space<vmem>>, %arg10: memref<1x1024xf32, #tpu.memory_space<vmem>>, %arg11: memref<16x256xf32, #tpu.memory_space<vmem>>, %arg12: memref<16x1024xbf16, #tpu.memory_space<vmem>>) attributes {dimension_semantics = [#tpu.dimension_semantics<parallel>], iteration_bounds = array<i64: 1>, scalar_prefetch = 0 : i64, scratch_operands = 0 : i64, tpu.core_type = #tpu.core_type<tc>, window_params = [{transform_indices = @transform_0, window_bounds = array<i64: 16, 1024>}, {transform_indices = @transform_1, window_bounds = array<i64: 16, 128>}, {pipeline_mode = #tpu.pipeline_mode<synchronous>, transform_indices = @transform_2, window_bounds = array<i64: 1024, 256>}, {pipeline_mode = #tpu.pipeline_mode<synchronous>, transform_indices = @transform_3, window_bounds = array<i64: 1, 256>}, {pipeline_mode = #tpu.pipeline_mode<synchronous>, transform_indices = @transform_4, window_bounds = array<i64: 256, 256>}, {pipeline_mode = #tpu.pipeline_mode<synchronous>, transform_indices = @transform_5, window_bounds = array<i64: 1, 256>}, {pipeline_mode = #tpu.pipeline_mode<synchronous>, transform_indices = @transform_6, window_bounds = array<i64: 128, 256>}, {pipeline_mode = #tpu.pipeline_mode<synchronous>, transform_indices = @transform_7, window_bounds = array<i64: 1, 256>}, {pipeline_mode = #tpu.pipeline_mode<synchronous>, transform_indices = @transform_8, window_bounds = array<i64: 256, 1024>}, {pipeline_mode = #tpu.pipeline_mode<synchronous>, transform_indices = @transform_9, window_bounds = array<i64: 1, 1024>}, {transform_indices = @transform_10, window_bounds = array<i64: 16, 256>}, {transform_indices = @transform_11, window_bounds = array<i64: 16, 1024>}]} {
    %c0 = arith.constant 0 : index
    %c0_0 = arith.constant 0 : index
    %0 = vector.load %arg1[%c0, %c0_0] : memref<16x1024xbf16, #tpu.memory_space<vmem>>, vector<16x1024xbf16>
    %c0_1 = arith.constant 0 : index
    %c0_2 = arith.constant 0 : index
    %1 = vector.load %arg3[%c0_1, %c0_2] : memref<1024x256xbf16, #tpu.memory_space<vmem>>, vector<1024x256xbf16>
    %cst = arith.constant dense<0.000000e+00> : vector<16x256xf32>
    %2 = tpu.matmul %0, %1, %cst {dimension_numbers = #tpu.dot_dimension_numbers<[1], [0], [0], [1], [0, 0, 1, 1], [], []>} : vector<16x1024xbf16>, vector<1024x256xbf16>, vector<16x256xf32> -> vector<16x256xf32>
    %c0_3 = arith.constant 0 : index
    %c0_4 = arith.constant 0 : index
    %3 = vector.load %arg4[%c0_3, %c0_4] : memref<1x256xf32, #tpu.memory_space<vmem>>, vector<1x256xf32>
    %4 = vector.broadcast %3 : vector<1x256xf32> to vector<16x256xf32>
    %5 = arith.addf %2, %4 : vector<16x256xf32>
    %cst_5 = arith.constant 0.000000e+00 : f32
    %6 = vector.broadcast %cst_5 : f32 to vector<16x256xf32>
    %7 = arith.maximumf %5, %6 : vector<16x256xf32>
    %8 = arith.truncf %7 : vector<16x256xf32> to vector<16x256xbf16>
    %c0_6 = arith.constant 0 : index
    %c0_7 = arith.constant 0 : index
    %9 = vector.load %arg5[%c0_6, %c0_7] : memref<256x256xbf16, #tpu.memory_space<vmem>>, vector<256x256xbf16>
    %cst_8 = arith.constant dense<0.000000e+00> : vector<16x256xf32>
    %10 = tpu.matmul %8, %9, %cst_8 {dimension_numbers = #tpu.dot_dimension_numbers<[1], [0], [0], [1], [0, 0, 1, 1], [], []>} : vector<16x256xbf16>, vector<256x256xbf16>, vector<16x256xf32> -> vector<16x256xf32>
    %c0_9 = arith.constant 0 : index
    %c0_10 = arith.constant 0 : index
    %11 = vector.load %arg6[%c0_9, %c0_10] : memref<1x256xf32, #tpu.memory_space<vmem>>, vector<1x256xf32>
    %12 = vector.broadcast %11 : vector<1x256xf32> to vector<16x256xf32>
    %13 = arith.addf %10, %12 : vector<16x256xf32>
    %c0_11 = arith.constant 0 : index
    %c0_12 = arith.constant 0 : index
    %14 = vector.load %arg11[%c0_11, %c0_12] : memref<16x256xf32, #tpu.memory_space<vmem>>, vector<16x256xf32>
    tpu.vector_store %arg11[%c0_11, %c0_12], %13 {strides = array<i32>} : memref<16x256xf32, #tpu.memory_space<vmem>>, vector<16x256xf32>,
    %15 = vector.extract_strided_slice %13 {offsets = [0, 0], sizes = [16, 128], strides = [1, 1]} : vector<16x256xf32> to vector<16x128xf32>
    %16 = vector.extract_strided_slice %13 {offsets = [0, 128], sizes = [16, 128], strides = [1, 1]} : vector<16x256xf32> to vector<16x128xf32>
    %17 = math.exp %16 : vector<16x128xf32>
    %c0_13 = arith.constant 0 : index
    %c0_14 = arith.constant 0 : index
    %18 = vector.load %arg2[%c0_13, %c0_14] : memref<16x128xf32, #tpu.memory_space<vmem>>, vector<16x128xf32>
    %19 = arith.mulf %17, %18 : vector<16x128xf32>
    %20 = arith.addf %15, %19 : vector<16x128xf32>
    %21 = arith.truncf %20 : vector<16x128xf32> to vector<16x128xbf16>
    %c0_15 = arith.constant 0 : index
    %c0_16 = arith.constant 0 : index
    %22 = vector.load %arg7[%c0_15, %c0_16] : memref<128x256xbf16, #tpu.memory_space<vmem>>, vector<128x256xbf16>
    %cst_17 = arith.constant dense<0.000000e+00> : vector<16x256xf32>
    %23 = tpu.matmul %21, %22, %cst_17 {dimension_numbers = #tpu.dot_dimension_numbers<[1], [0], [0], [1], [0, 0, 1, 1], [], []>} : vector<16x128xbf16>, vector<128x256xbf16>, vector<16x256xf32> -> vector<16x256xf32>
    %c0_18 = arith.constant 0 : index
    %c0_19 = arith.constant 0 : index
    %24 = vector.load %arg8[%c0_18, %c0_19] : memref<1x256xf32, #tpu.memory_space<vmem>>, vector<1x256xf32>
    %25 = vector.broadcast %24 : vector<1x256xf32> to vector<16x256xf32>
    %26 = arith.addf %23, %25 : vector<16x256xf32>
    %cst_20 = arith.constant 0.000000e+00 : f32
    %27 = vector.broadcast %cst_20 : f32 to vector<16x256xf32>
    %28 = arith.maximumf %26, %27 : vector<16x256xf32>
    %29 = arith.truncf %28 : vector<16x256xf32> to vector<16x256xbf16>
    %c0_21 = arith.constant 0 : index
    %c0_22 = arith.constant 0 : index
    %30 = vector.load %arg9[%c0_21, %c0_22] : memref<256x1024xbf16, #tpu.memory_space<vmem>>, vector<256x1024xbf16>
    %cst_23 = arith.constant dense<0.000000e+00> : vector<16x1024xf32>
    %31 = tpu.matmul %29, %30, %cst_23 {dimension_numbers = #tpu.dot_dimension_numbers<[1], [0], [0], [1], [0, 0, 1, 1], [], []>} : vector<16x256xbf16>, vector<256x1024xbf16>, vector<16x1024xf32> -> vector<16x1024xf32>
    %c0_24 = arith.constant 0 : index
    %c0_25 = arith.constant 0 : index
    %32 = vector.load %arg10[%c0_24, %c0_25] : memref<1x1024xf32, #tpu.memory_space<vmem>>, vector<1x1024xf32>
    %33 = vector.broadcast %32 : vector<1x1024xf32> to vector<16x1024xf32>
    %34 = arith.addf %31, %33 : vector<16x1024xf32>
    %35 = arith.negf %34 : vector<16x1024xf32>
    %36 = math.exp %35 : vector<16x1024xf32>
    %cst_26 = arith.constant 1.000000e+00 : f32
    %37 = vector.broadcast %cst_26 : f32 to vector<16x1024xf32>
    %38 = arith.addf %37, %36 : vector<16x1024xf32>
    %39 = arith.divf %37, %38 : vector<16x1024xf32>
    %40 = arith.truncf %39 : vector<16x1024xf32> to vector<16x1024xbf16>
    %c0_27 = arith.constant 0 : index
    %c0_28 = arith.constant 0 : index
    %41 = vector.load %arg12[%c0_27, %c0_28] : memref<16x1024xbf16, #tpu.memory_space<vmem>>, vector<16x1024xbf16>
    tpu.vector_store %arg12[%c0_27, %c0_28], %40 {strides = array<i32>} : memref<16x1024xbf16, #tpu.memory_space<vmem>>, vector<16x1024xbf16>,
    return
  }
  func.func @transform_0(%arg0: i32) -> (i32, i32) {
    %c0_i32 = arith.constant 0 : i32
    %c0_i32_0 = arith.constant 0 : i32
    return %arg0, %c0_i32 : i32, i32
  }
  func.func @transform_1(%arg0: i32) -> (i32, i32) {
    %c0_i32 = arith.constant 0 : i32
    %c0_i32_0 = arith.constant 0 : i32
    return %arg0, %c0_i32 : i32, i32
  }
  func.func @transform_2(%arg0: i32) -> (i32, i32) {
    %c0_i32 = arith.constant 0 : i32
    %c0_i32_0 = arith.constant 0 : i32
    %c0_i32_1 = arith.constant 0 : i32
    return %c0_i32, %c0_i32_0 : i32, i32
  }
  func.func @transform_3(%arg0: i32) -> (i32, i32) {
    %c0_i32 = arith.constant 0 : i32
    %c0_i32_0 = arith.constant 0 : i32
    %c0_i32_1 = arith.constant 0 : i32
    return %c0_i32, %c0_i32_0 : i32, i32
  }
  func.func @transform_4(%arg0: i32) -> (i32, i32) {
    %c0_i32 = arith.constant 0 : i32
    %c0_i32_0 = arith.constant 0 : i32
    %c0_i32_1 = arith.constant 0 : i32
    return %c0_i32, %c0_i32_0 : i32, i32
  }
  func.func @transform_5(%arg0: i32) -> (i32, i32) {
    %c0_i32 = arith.constant 0 : i32
    %c0_i32_0 = arith.constant 0 : i32
    %c0_i32_1 = arith.constant 0 : i32
    return %c0_i32, %c0_i32_0 : i32, i32
  }
  func.func @transform_6(%arg0: i32) -> (i32, i32) {
    %c0_i32 = arith.constant 0 : i32
    %c0_i32_0 = arith.constant 0 : i32
    %c0_i32_1 = arith.constant 0 : i32
    return %c0_i32, %c0_i32_0 : i32, i32
  }
  func.func @transform_7(%arg0: i32) -> (i32, i32) {
    %c0_i32 = arith.constant 0 : i32
    %c0_i32_0 = arith.constant 0 : i32
    %c0_i32_1 = arith.constant 0 : i32
    return %c0_i32, %c0_i32_0 : i32, i32
  }
  func.func @transform_8(%arg0: i32) -> (i32, i32) {
    %c0_i32 = arith.constant 0 : i32
    %c0_i32_0 = arith.constant 0 : i32
    %c0_i32_1 = arith.constant 0 : i32
    return %c0_i32, %c0_i32_0 : i32, i32
  }
  func.func @transform_9(%arg0: i32) -> (i32, i32) {
    %c0_i32 = arith.constant 0 : i32
    %c0_i32_0 = arith.constant 0 : i32
    %c0_i32_1 = arith.constant 0 : i32
    return %c0_i32, %c0_i32_0 : i32, i32
  }
  func.func @transform_10(%arg0: i32) -> (i32, i32) {
    %c0_i32 = arith.constant 0 : i32
    %c0_i32_0 = arith.constant 0 : i32
    return %arg0, %c0_i32 : i32, i32
  }
  func.func @transform_11(%arg0: i32) -> (i32, i32) {
    %c0_i32 = arith.constant 0 : i32
    %c0_i32_0 = arith.constant 0 : i32
    return %arg0, %c0_i32 : i32, i32
  }
}

</mosaic_0001>

<llo_original>
// kernel: vae_forward.1
$region0: #{vae_forward.1}
  #allocation0 [shape = 'u32[]', space=smem, size = 0x4, offset = 0x4, fixed_abs, tag = 'smem constant byte address 0x4 - core index']
  #allocation1 [shape = 'u32[144,128]{1,0:T(1,128)}', space=vmem, size = 0x12000, scoped, tag = 'internal scratch']
  %s0 = inlined_call_operand.vmem [shape: bf16[16,1024], index: 0, kind: input, shape index: {}]
  %s1 = inlined_call_operand.vmem [shape: f32[16,128], index: 1, kind: input, shape index: {}]
  %s2 = inlined_call_operand.hbm [shape: bf16[1024,256], index: 2, kind: input, shape index: {}]
  %s3 = inlined_call_operand.vmem [shape: f32[1,256], index: 3, kind: input, shape index: {}]
  %s4 = inlined_call_operand.vmem [shape: bf16[256,256], index: 4, kind: input, shape index: {}]
  %s5 = inlined_call_operand.vmem [shape: f32[1,256], index: 5, kind: input, shape index: {}]
  %s6 = inlined_call_operand.hbm [shape: bf16[128,256], index: 6, kind: input, shape index: {}]
  %s7 = inlined_call_operand.vmem [shape: f32[1,256], index: 7, kind: input, shape index: {}]
  %s8 = inlined_call_operand.hbm [shape: bf16[256,1024], index: 8, kind: input, shape index: {}]
  %s9 = inlined_call_operand.vmem [shape: f32[1,1024], index: 9, kind: input, shape index: {}]
  %s10 = inlined_call_operand.vmem [shape: f32[16,256], index: 10, kind: output, shape index: {0}]
  %s11 = inlined_call_operand.vmem [shape: bf16[16,1024], index: 11, kind: output, shape index: {1}]
  %12 = xla_tuple %s10, %s11
  %s13 = sld [smem:[#allocation0]]
  $region70: #{vae_forward.1} parent=0
    _
  %s15 = ssub.s32 1, %s13
  %s16 = scalar_select 0, %s15, %s13
  $region1: #{vae_forward.1} parent=0
    #allocation2 [shape = 'u8[524288]{0}', space=vmem, size = 0x80000, scoped, tag = 'input window, operand 2, single buffered']
    #allocation3 [shape = 's32[1]{0}', space=sflag, size = 0x4, scoped, tag = 'scoped memory for vae_forward.1']
    #allocation4 [shape = 'u8[65536]{0}', space=vmem, size = 0x10000, scoped, tag = 'input window, operand 6, single buffered']
    #allocation5 [shape = 's32[1]{0}', space=sflag, size = 0x4, scoped, tag = 'scoped memory for vae_forward.1']
    #allocation6 [shape = 'u8[524288]{0}', space=vmem, size = 0x80000, scoped, tag = 'input window, operand 8, single buffered']
    %17 = vsyncpa [#allocation3], 0
    %18 = vsyncpa [#allocation5], 0
    // Predicated region
    $region2: #{vae_forward.1} parent=1 // pred_check
      _
    $region3: #{vae_forward.1} parent=1 // pred_check_branch
      %20 = sbr.rel (0) target = $region5
    $region4: #{vae_forward.1} parent=1 // pred_region
      _
    $region5: #{vae_forward.1} parent=1 // pred_fallthru
      _
    // Predicated region
    $region6: #{vae_forward.1} parent=1 // pred_check
      _
    $region7: #{vae_forward.1} parent=1 // pred_check_branch
      %22 = sbr.rel (0) target = $region9
    $region8: #{vae_forward.1} parent=1 // pred_region
      _
    $region9: #{vae_forward.1} parent=1 // pred_fallthru
      _
    // Predicated region
    $region10: #{vae_forward.1} parent=1 // pred_check
      _
    $region11: #{vae_forward.1} parent=1 // pred_check_branch
      %24 = sbr.rel (0) target = $region13
    $region12: #{vae_forward.1} parent=1 // pred_region
      %s26 = ssub.s32 16384, 16384
      %27 = vsyncadd [#allocation3], %s26
      %s28 = sshll.u32 [#allocation2], 4
      %s29 = int_to_ptr.vmem [resolvable:$true] %s28
      %34 = dma.hbm_to_vmem [thread:$0]  %s2, 16384, %s29, [#allocation3], 128, 128, 8
    $region13: #{vae_forward.1} parent=1 // pred_fallthru
      _
    // Predicated region
    $region14: #{vae_forward.1} parent=1 // pred_check
      _
    $region15: #{vae_forward.1} parent=1 // pred_check_branch
      %36 = sbr.rel (0) target = $region17
    $region16: #{vae_forward.1} parent=1 // pred_region
      _
    $region17: #{vae_forward.1} parent=1 // pred_fallthru
      _
    // Predicated region
    $region18: #{vae_forward.1} parent=1 // pred_check
      _
    $region19: #{vae_forward.1} parent=1 // pred_check_branch
      %38 = sbr.rel (0) target = $region21
    $region20: #{vae_forward.1} parent=1 // pred_region
      _
    $region21: #{vae_forward.1} parent=1 // pred_fallthru
      _
    // Predicated region
    $region22: #{vae_forward.1} parent=1 // pred_check
      _
    $region23: #{vae_forward.1} parent=1 // pred_check_branch
      %40 = sbr.rel (0) target = $region25
    $region24: #{vae_forward.1} parent=1 // pred_region
      _
    $region25: #{vae_forward.1} parent=1 // pred_fallthru
      _
    // Predicated region
    $region26: #{vae_forward.1} parent=1 // pred_check
      _
    $region27: #{vae_forward.1} parent=1 // pred_check_branch
      %42 = sbr.rel (0) target = $region29
    $region28: #{vae_forward.1} parent=1 // pred_region
      %s44 = ssub.s32 2048, 2048
      %45 = vsyncadd [#allocation5], %s44
      %s46 = sshll.u32 [#allocation4], 4
      %s47 = int_to_ptr.vmem [resolvable:$true] %s46
      %52 = dma.hbm_to_vmem [thread:$0]  %s6, 2048, %s47, [#allocation5], 128, 128, 8
    $region29: #{vae_forward.1} parent=1 // pred_fallthru
      _
    // Predicated region
    $region30: #{vae_forward.1} parent=1 // pred_check
      _
    $region31: #{vae_forward.1} parent=1 // pred_check_branch
      %54 = sbr.rel (0) target = $region33
    $region32: #{vae_forward.1} parent=1 // pred_region
      _
    $region33: #{vae_forward.1} parent=1 // pred_fallthru
      _
    // Predicated region
    $region34: #{vae_forward.1} parent=1 // pred_check
      _
    $region35: #{vae_forward.1} parent=1 // pred_check_branch
      %56 = sbr.rel (0) target = $region37
    $region36: #{vae_forward.1} parent=1 // pred_region
      %s58 = ssub.s32 16384, 16384
      %59 = vsyncadd [#allocation5], %s58
      %s60 = sshll.u32 [#allocation6], 4
      %s61 = int_to_ptr.vmem [resolvable:$true] %s60
      %66 = dma.hbm_to_vmem [thread:$0]  %s8, 16384, %s61, [#allocation5], 512, 512, 32
    $region37: #{vae_forward.1} parent=1 // pred_fallthru
      _
    // Predicated region
    $region38: #{vae_forward.1} parent=1 // pred_check
      _
    $region39: #{vae_forward.1} parent=1 // pred_check_branch
      %68 = sbr.rel (0) target = $region41
    $region40: #{vae_forward.1} parent=1 // pred_region
      _
    $region41: #{vae_forward.1} parent=1 // pred_fallthru
      _
    // Predicated region
    $region42: #{vae_forward.1} parent=1 // pred_check
      _
    $region43: #{vae_forward.1} parent=1 // pred_check_branch
      %70 = sbr.rel (0) target = $region45
    $region44: #{vae_forward.1} parent=1 // pred_region
      %71 = dma.done [#allocation3], 16384
    $region45: #{vae_forward.1} parent=1 // pred_fallthru
      _
    // Predicated region
    $region46: #{vae_forward.1} parent=1 // pred_check
      _
    $region47: #{vae_forward.1} parent=1 // pred_check_branch
      %73 = sbr.rel (0) target = $region49
    $region48: #{vae_forward.1} parent=1 // pred_region
      %74 = dma.done [#allocation5], 2048
    $region49: #{vae_forward.1} parent=1 // pred_fallthru
      _
    // Predicated region
    $region50: #{vae_forward.1} parent=1 // pred_check
      _
    $region51: #{vae_forward.1} parent=1 // pred_check_branch
      %76 = sbr.rel (0) target = $region53
    $region52: #{vae_forward.1} parent=1 // pred_region
      %77 = dma.done [#allocation5], 16384
    $region53: #{vae_forward.1} parent=1 // pred_fallthru
      _
    %v79 = vld [vmem:[%s0] sm:$0xff]
    %v80 = vld [vmem:[%s0 + $0x8] sm:$0xff]
    %v81 = vld [vmem:[%s0 + $0x10] sm:$0xff]
    %v82 = vld [vmem:[%s0 + $0x18] sm:$0xff]
    %v83 = vld [vmem:[%s0 + $0x20] sm:$0xff]
    %v84 = vld [vmem:[%s0 + $0x28] sm:$0xff]
    %v85 = vld [vmem:[%s0 + $0x30] sm:$0xff]
    %v86 = vld [vmem:[%s0 + $0x38] sm:$0xff]
    %v87 = vld [vmem:[#allocation2] sm:$0xff]
    %v88 = vld [vmem:[#allocation2 + $0x8] sm:$0xff]
    %v89 = vld [vmem:[#allocation2 + $0x10] sm:$0xff]
    %v90 = vld [vmem:[#allocation2 + $0x18] sm:$0xff]
    %v91 = vld [vmem:[#allocation2 + $0x20] sm:$0xff]
    %v92 = vld [vmem:[#allocation2 + $0x28] sm:$0xff]
    %v93 = vld [vmem:[#allocation2 + $0x30] sm:$0xff]
    %v94 = vld [vmem:[#allocation2 + $0x38] sm:$0xff]
    %v95 = vld [vmem:[#allocation2 + $0x40] sm:$0xff]
    %v96 = vld [vmem:[#allocation2 + $0x48] sm:$0xff]
    %v97 = vld [vmem:[#allocation2 + $0x50] sm:$0xff]
    %v98 = vld [vmem:[#allocation2 + $0x58] sm:$0xff]
    %v99 = vld [vmem:[#allocation2 + $0x60] sm:$0xff]
    %v100 = vld [vmem:[#allocation2 + $0x68] sm:$0xff]
    %v101 = vld [vmem:[#allocation2 + $0x70] sm:$0xff]
    %v102 = vld [vmem:[#allocation2 + $0x78] sm:$0xff]
    %v103 = vld [vmem:[#allocation2 + $0x80] sm:$0xff]
    %v104 = vld [vmem:[#allocation2 + $0x88] sm:$0xff]
    %v105 = vld [vmem:[#allocation2 + $0x90] sm:$0xff]
    %v106 = vld [vmem:[#allocation2 + $0x98] sm:$0xff]
    %v107 = vld [vmem:[#allocation2 + $0xa0] sm:$0xff]
    %v108 = vld [vmem:[#allocation2 + $0xa8] sm:$0xff]
    %v109 = vld [vmem:[#allocation2 + $0xb0] sm:$0xff]
    %v110 = vld [vmem:[#allocation2 + $0xb8] sm:$0xff]
    %v111 = vld [vmem:[#allocation2 + $0xc0] sm:$0xff]
    %v112 = vld [vmem:[#allocation2 + $0xc8] sm:$0xff]
    %v113 = vld [vmem:[#allocation2 + $0xd0] sm:$0xff]
    %v114 = vld [vmem:[#allocation2 + $0xd8] sm:$0xff]
    %v115 = vld [vmem:[#allocation2 + $0xe0] sm:$0xff]
    %v116 = vld [vmem:[#allocation2 + $0xe8] sm:$0xff]
    %v117 = vld [vmem:[#allocation2 + $0xf0] sm:$0xff]
    %v118 = vld [vmem:[#allocation2 + $0xf8] sm:$0xff]
    %v119 = vld [vmem:[#allocation2 + $0x100] sm:$0xff]
    %v120 = vld [vmem:[#allocation2 + $0x108] sm:$0xff]
    %v121 = vld [vmem:[#allocation2 + $0x110] sm:$0xff]
    %v122 = vld [vmem:[#allocation2 + $0x118] sm:$0xff]
    %v123 = vld [vmem:[#allocation2 + $0x120] sm:$0xff]
    %v124 = vld [vmem:[#allocation2 + $0x128] sm:$0xff]
    %v125 = vld [vmem:[#allocation2 + $0x130] sm:$0xff]
    %v126 = vld [vmem:[#allocation2 + $0x138] sm:$0xff]
    %v127 = vld [vmem:[#allocation2 + $0x140] sm:$0xff]
    %v128 = vld [vmem:[#allocation2 + $0x148] sm:$0xff]
    %v129 = vld [vmem:[#allocation2 + $0x150] sm:$0xff]
    %v130 = vld [vmem:[#allocation2 + $0x158] sm:$0xff]
    %v131 = vld [vmem:[#allocation2 + $0x160] sm:$0xff]
    %v132 = vld [vmem:[#allocation2 + $0x168] sm:$0xff]
    %v133 = vld [vmem:[#allocation2 + $0x170] sm:$0xff]
    %v134 = vld [vmem:[#allocation2 + $0x178] sm:$0xff]
    %v135 = vld [vmem:[#allocation2 + $0x180] sm:$0xff]
    %v136 = vld [vmem:[#allocation2 + $0x188] sm:$0xff]
    %v137 = vld [vmem:[#allocation2 + $0x190] sm:$0xff]
    %v138 = vld [vmem:[#allocation2 + $0x198] sm:$0xff]
    %v139 = vld [vmem:[#allocation2 + $0x1a0] sm:$0xff]
    %v140 = vld [vmem:[#allocation2 + $0x1a8] sm:$0xff]
    %v141 = vld [vmem:[#allocation2 + $0x1b0] sm:$0xff]
    %v142 = vld [vmem:[#allocation2 + $0x1b8] sm:$0xff]
    %v143 = vld [vmem:[#allocation2 + $0x1c0] sm:$0xff]
    %v144 = vld [vmem:[#allocation2 + $0x1c8] sm:$0xff]
    %v145 = vld [vmem:[#allocation2 + $0x1d0] sm:$0xff]
    %v146 = vld [vmem:[#allocation2 + $0x1d8] sm:$0xff]
    %v147 = vld [vmem:[#allocation2 + $0x1e0] sm:$0xff]
    %v148 = vld [vmem:[#allocation2 + $0x1e8] sm:$0xff]
    %v149 = vld [vmem:[#allocation2 + $0x1f0] sm:$0xff]
    %v150 = vld [vmem:[#allocation2 + $0x1f8] sm:$0xff]
    %v151 = vld [vmem:[#allocation2 + $0x200] sm:$0xff]
    %v152 = vld [vmem:[#allocation2 + $0x208] sm:$0xff]
    %v153 = vld [vmem:[#allocation2 + $0x210] sm:$0xff]
    %v154 = vld [vmem:[#allocation2 + $0x218] sm:$0xff]
    %v155 = vld [vmem:[#allocation2 + $0x220] sm:$0xff]
    %v156 = vld [vmem:[#allocation2 + $0x228] sm:$0xff]
    %v157 = vld [vmem:[#allocation2 + $0x230] sm:$0xff]
    %v158 = vld [vmem:[#allocation2 + $0x238] sm:$0xff]
    %v159 = vld [vmem:[#allocation2 + $0x240] sm:$0xff]
    %v160 = vld [vmem:[#allocation2 + $0x248] sm:$0xff]
    %v161 = vld [vmem:[#allocation2 + $0x250] sm:$0xff]
    %v162 = vld [vmem:[#allocation2 + $0x258] sm:$0xff]
    %v163 = vld [vmem:[#allocation2 + $0x260] sm:$0xff]
    %v164 = vld [vmem:[#allocation2 + $0x268] sm:$0xff]
    %v165 = vld [vmem:[#allocation2 + $0x270] sm:$0xff]
    %v166 = vld [vmem:[#allocation2 + $0x278] sm:$0xff]
    %v167 = vld [vmem:[#allocation2 + $0x280] sm:$0xff]
    %v168 = vld [vmem:[#allocation2 + $0x288] sm:$0xff]
    %v169 = vld [vmem:[#allocation2 + $0x290] sm:$0xff]
    %v170 = vld [vmem:[#allocation2 + $0x298] sm:$0xff]
    %v171 = vld [vmem:[#allocation2 + $0x2a0] sm:$0xff]
    %v172 = vld [vmem:[#allocation2 + $0x2a8] sm:$0xff]
    %v173 = vld [vmem:[#allocation2 + $0x2b0] sm:$0xff]
    %v174 = vld [vmem:[#allocation2 + $0x2b8] sm:$0xff]
    %v175 = vld [vmem:[#allocation2 + $0x2c0] sm:$0xff]
    %v176 = vld [vmem:[#allocation2 + $0x2c8] sm:$0xff]
    %v177 = vld [vmem:[#allocation2 + $0x2d0] sm:$0xff]
    %v178 = vld [vmem:[#allocation2 + $0x2d8] sm:$0xff]
    %v179 = vld [vmem:[#allocation2 + $0x2e0] sm:$0xff]
    %v180 = vld [vmem:[#allocation2 + $0x2e8] sm:$0xff]
    %v181 = vld [vmem:[#allocation2 + $0x2f0] sm:$0xff]
    %v182 = vld [vmem:[#allocation2 + $0x2f8] sm:$0xff]
    %v183 = vld [vmem:[#allocation2 + $0x300] sm:$0xff]
    %v184 = vld [vmem:[#allocation2 + $0x308] sm:$0xff]
    %v185 = vld [vmem:[#allocation2 + $0x310] sm:$0xff]
    %v186 = vld [vmem:[#allocation2 + $0x318] sm:$0xff]
    %v187 = vld [vmem:[#allocation2 + $0x320] sm:$0xff]
    %v188 = vld [vmem:[#allocation2 + $0x328] sm:$0xff]
    %v189 = vld [vmem:[#allocation2 + $0x330] sm:$0xff]
    %v190 = vld [vmem:[#allocation2 + $0x338] sm:$0xff]
    %v191 = vld [vmem:[#allocation2 + $0x340] sm:$0xff]
    %v192 = vld [vmem:[#allocation2 + $0x348] sm:$0xff]
    %v193 = vld [vmem:[#allocation2 + $0x350] sm:$0xff]
    %v194 = vld [vmem:[#allocation2 + $0x358] sm:$0xff]
    %v195 = vld [vmem:[#allocation2 + $0x360] sm:$0xff]
    %v196 = vld [vmem:[#allocation2 + $0x368] sm:$0xff]
    %v197 = vld [vmem:[#allocation2 + $0x370] sm:$0xff]
    %v198 = vld [vmem:[#allocation2 + $0x378] sm:$0xff]
    %v199 = vld [vmem:[#allocation2 + $0x380] sm:$0xff]
    %v200 = vld [vmem:[#allocation2 + $0x388] sm:$0xff]
    %v201 = vld [vmem:[#allocation2 + $0x390] sm:$0xff]
    %v202 = vld [vmem:[#allocation2 + $0x398] sm:$0xff]
    %v203 = vld [vmem:[#allocation2 + $0x3a0] sm:$0xff]
    %v204 = vld [vmem:[#allocation2 + $0x3a8] sm:$0xff]
    %v205 = vld [vmem:[#allocation2 + $0x3b0] sm:$0xff]
    %v206 = vld [vmem:[#allocation2 + $0x3b8] sm:$0xff]
    %v207 = vld [vmem:[#allocation2 + $0x3c0] sm:$0xff]
    %v208 = vld [vmem:[#allocation2 + $0x3c8] sm:$0xff]
    %v209 = vld [vmem:[#allocation2 + $0x3d0] sm:$0xff]
    %v210 = vld [vmem:[#allocation2 + $0x3d8] sm:$0xff]
    %v211 = vld [vmem:[#allocation2 + $0x3e0] sm:$0xff]
    %v212 = vld [vmem:[#allocation2 + $0x3e8] sm:$0xff]
    %v213 = vld [vmem:[#allocation2 + $0x3f0] sm:$0xff]
    %v214 = vld [vmem:[#allocation2 + $0x3f8] sm:$0xff]
    %v215 = vld [vmem:[%s3] sm:$0x3]
    %v217 = vlaneseq
    %v218 = vshrl.u32 %v217, 7
    %v219 = vsub.s32 0, %v218
    %v220 = vrot.slane %v215, %v219
    %v221 = vlaneseq
    %v222 = vshrl.u32 %v221, 7
    %v223 = vsub.s32 1, %v222
    %v224 = vrot.slane %v215, %v223
    %v235 = vunpack.c.l.b16 %v79
    %v236 = vunpack.c.h.b16 %v79
    %v237 = vunpack.c.l.b16 %v80
    %v238 = vunpack.c.h.b16 %v80
    %v239 = vunpack.c.l.b16 %v81
    %v240 = vunpack.c.h.b16 %v81
    %v241 = vunpack.c.l.b16 %v82
    %v242 = vunpack.c.h.b16 %v82
    %v243 = vunpack.c.l.b16 %v83
    %v244 = vunpack.c.h.b16 %v83
    %v245 = vunpack.c.l.b16 %v84
    %v246 = vunpack.c.h.b16 %v84
    %v247 = vunpack.c.l.b16 %v85
    %v248 = vunpack.c.h.b16 %v85
    %v249 = vunpack.c.l.b16 %v86
    %v250 = vunpack.c.h.b16 %v86
    %v251 = vpack.c.b16 %v243, %v235
    %v252 = vpack.c.b16 %v244, %v236
    %v253 = vpack.c.b16 %v245, %v237
    %v254 = vpack.c.b16 %v246, %v238
    %v255 = vpack.c.b16 %v247, %v239
    %v256 = vpack.c.b16 %v248, %v240
    %v257 = vpack.c.b16 %v249, %v241
    %v258 = vpack.c.b16 %v250, %v242
    %v395 = vunpack.c.l.b16 %v87
    %v396 = vunpack.c.h.b16 %v87
    %v397 = vunpack.c.l.b16 %v88
    %v398 = vunpack.c.h.b16 %v88
    %v399 = vunpack.c.l.b16 %v89
    %v400 = vunpack.c.h.b16 %v89
    %v401 = vunpack.c.l.b16 %v90
    %v402 = vunpack.c.h.b16 %v90
    %v403 = vunpack.c.l.b16 %v91
    %v404 = vunpack.c.h.b16 %v91
    %v405 = vunpack.c.l.b16 %v92
    %v406 = vunpack.c.h.b16 %v92
    %v407 = vunpack.c.l.b16 %v93
    %v408 = vunpack.c.h.b16 %v93
    %v409 = vunpack.c.l.b16 %v94
    %v410 = vunpack.c.h.b16 %v94
    %v411 = vunpack.c.l.b16 %v95
    %v412 = vunpack.c.h.b16 %v95
    %v413 = vunpack.c.l.b16 %v96
    %v414 = vunpack.c.h.b16 %v96
    %v415 = vunpack.c.l.b16 %v97
    %v416 = vunpack.c.h.b16 %v97
    %v417 = vunpack.c.l.b16 %v98
    %v418 = vunpack.c.h.b16 %v98
    %v419 = vunpack.c.l.b16 %v99
    %v420 = vunpack.c.h.b16 %v99
    %v421 = vunpack.c.l.b16 %v100
    %v422 = vunpack.c.h.b16 %v100
    %v423 = vunpack.c.l.b16 %v101
    %v424 = vunpack.c.h.b16 %v101
    %v425 = vunpack.c.l.b16 %v102
    %v426 = vunpack.c.h.b16 %v102
    %v427 = vunpack.c.l.b16 %v103
    %v428 = vunpack.c.h.b16 %v103
    %v429 = vunpack.c.l.b16 %v104
    %v430 = vunpack.c.h.b16 %v104
    %v431 = vunpack.c.l.b16 %v105
    %v432 = vunpack.c.h.b16 %v105
    %v433 = vunpack.c.l.b16 %v106
    %v434 = vunpack.c.h.b16 %v106
    %v435 = vunpack.c.l.b16 %v107
    %v436 = vunpack.c.h.b16 %v107
    %v437 = vunpack.c.l.b16 %v108
    %v438 = vunpack.c.h.b16 %v108
    %v439 = vunpack.c.l.b16 %v109
    %v440 = vunpack.c.h.b16 %v109
    %v441 = vunpack.c.l.b16 %v110
    %v442 = vunpack.c.h.b16 %v110
    %v443 = vunpack.c.l.b16 %v111
    %v444 = vunpack.c.h.b16 %v111
    %v445 = vunpack.c.l.b16 %v112
    %v446 = vunpack.c.h.b16 %v112
    %v447 = vunpack.c.l.b16 %v113
    %v448 = vunpack.c.h.b16 %v113
    %v449 = vunpack.c.l.b16 %v114
    %v450 = vunpack.c.h.b16 %v114
    %v451 = vunpack.c.l.b16 %v115
    %v452 = vunpack.c.h.b16 %v115
    %v453 = vunpack.c.l.b16 %v116
    %v454 = vunpack.c.h.b16 %v116
    %v455 = vunpack.c.l.b16 %v117
    %v456 = vunpack.c.h.b16 %v117
    %v457 = vunpack.c.l.b16 %v118
    %v458 = vunpack.c.h.b16 %v118
    %v459 = vunpack.c.l.b16 %v119
    %v460 = vunpack.c.h.b16 %v119
    %v461 = vunpack.c.l.b16 %v120
    %v462 = vunpack.c.h.b16 %v120
    %v463 = vunpack.c.l.b16 %v121
    %v464 = vunpack.c.h.b16 %v121
    %v465 = vunpack.c.l.b16 %v122
    %v466 = vunpack.c.h.b16 %v122
    %v467 = vunpack.c.l.b16 %v123
    %v468 = vunpack.c.h.b16 %v123
    %v469 = vunpack.c.l.b16 %v124
    %v470 = vunpack.c.h.b16 %v124
    %v471 = vunpack.c.l.b16 %v125
    %v472 = vunpack.c.h.b16 %v125
    %v473 = vunpack.c.l.b16 %v126
    %v474 = vunpack.c.h.b16 %v126
    %v475 = vunpack.c.l.b16 %v127
    %v476 = vunpack.c.h.b16 %v127
    %v477 = vunpack.c.l.b16 %v128
    %v478 = vunpack.c.h.b16 %v128
    %v479 = vunpack.c.l.b16 %v129
    %v480 = vunpack.c.h.b16 %v129
    %v481 = vunpack.c.l.b16 %v130
    %v482 = vunpack.c.h.b16 %v130
    %v483 = vunpack.c.l.b16 %v131
    %v484 = vunpack.c.h.b16 %v131
    %v485 = vunpack.c.l.b16 %v132
    %v486 = vunpack.c.h.b16 %v132
    %v487 = vunpack.c.l.b16 %v133
    %v488 = vunpack.c.h.b16 %v133
    %v489 = vunpack.c.l.b16 %v134
    %v490 = vunpack.c.h.b16 %v134
    %v491 = vunpack.c.l.b16 %v135
    %v492 = vunpack.c.h.b16 %v135
    %v493 = vunpack.c.l.b16 %v136
    %v494 = vunpack.c.h.b16 %v136
    %v495 = vunpack.c.l.b16 %v137
    %v496 = vunpack.c.h.b16 %v137
    %v497 = vunpack.c.l.b16 %v138
    %v498 = vunpack.c.h.b16 %v138
    %v499 = vunpack.c.l.b16 %v139
    %v500 = vunpack.c.h.b16 %v139
    %v501 = vunpack.c.l.b16 %v140
    %v502 = vunpack.c.h.b16 %v140
    %v503 = vunpack.c.l.b16 %v141
    %v504 = vunpack.c.h.b16 %v141
    %v505 = vunpack.c.l.b16 %v142
    %v506 = vunpack.c.h.b16 %v142
    %v507 = vunpack.c.l.b16 %v143
    %v508 = vunpack.c.h.b16 %v143
    %v509 = vunpack.c.l.b16 %v144
    %v510 = vunpack.c.h.b16 %v144
    %v511 = vunpack.c.l.b16 %v145
    %v512 = vunpack.c.h.b16 %v145
    %v513 = vunpack.c.l.b16 %v146
    %v514 = vunpack.c.h.b16 %v146
    %v515 = vunpack.c.l.b16 %v147
    %v516 = vunpack.c.h.b16 %v147
    %v517 = vunpack.c.l.b16 %v148
    %v518 = vunpack.c.h.b16 %v148
    %v519 = vunpack.c.l.b16 %v149
    %v520 = vunpack.c.h.b16 %v149
    %v521 = vunpack.c.l.b16 %v150
    %v522 = vunpack.c.h.b16 %v150
    %v523 = vunpack.c.l.b16 %v151
    %v524 = vunpack.c.h.b16 %v151
    %v525 = vunpack.c.l.b16 %v152
    %v526 = vunpack.c.h.b16 %v152
    %v527 = vunpack.c.l.b16 %v153
    %v528 = vunpack.c.h.b16 %v153
    %v529 = vunpack.c.l.b16 %v154
    %v530 = vunpack.c.h.b16 %v154
    %v531 = vunpack.c.l.b16 %v155
    %v532 = vunpack.c.h.b16 %v155
    %v533 = vunpack.c.l.b16 %v156
    %v534 = vunpack.c.h.b16 %v156
    %v535 = vunpack.c.l.b16 %v157
    %v536 = vunpack.c.h.b16 %v157
    %v537 = vunpack.c.l.b16 %v158
    %v538 = vunpack.c.h.b16 %v158
    %v539 = vunpack.c.l.b16 %v159
    %v540 = vunpack.c.h.b16 %v159
    %v541 = vunpack.c.l.b16 %v160
    %v542 = vunpack.c.h.b16 %v160
    %v543 = vunpack.c.l.b16 %v161
    %v544 = vunpack.c.h.b16 %v161
    %v545 = vunpack.c.l.b16 %v162
    %v546 = vunpack.c.h.b16 %v162
    %v547 = vunpack.c.l.b16 %v163
    %v548 = vunpack.c.h.b16 %v163
    %v549 = vunpack.c.l.b16 %v164
    %v550 = vunpack.c.h.b16 %v164
    %v551 = vunpack.c.l.b16 %v165
    %v552 = vunpack.c.h.b16 %v165
    %v553 = vunpack.c.l.b16 %v166
    %v554 = vunpack.c.h.b16 %v166
    %v555 = vunpack.c.l.b16 %v167
    %v556 = vunpack.c.h.b16 %v167
    %v557 = vunpack.c.l.b16 %v168
    %v558 = vunpack.c.h.b16 %v168
    %v559 = vunpack.c.l.b16 %v169
    %v560 = vunpack.c.h.b16 %v169
    %v561 = vunpack.c.l.b16 %v170
    %v562 = vunpack.c.h.b16 %v170
    %v563 = vunpack.c.l.b16 %v171
    %v564 = vunpack.c.h.b16 %v171
    %v565 = vunpack.c.l.b16 %v172
    %v566 = vunpack.c.h.b16 %v172
    %v567 = vunpack.c.l.b16 %v173
    %v568 = vunpack.c.h.b16 %v173
    %v569 = vunpack.c.l.b16 %v174
    %v570 = vunpack.c.h.b16 %v174
    %v571 = vunpack.c.l.b16 %v175
    %v572 = vunpack.c.h.b16 %v175
    %v573 = vunpack.c.l.b16 %v176
    %v574 = vunpack.c.h.b16 %v176
    %v575 = vunpack.c.l.b16 %v177
    %v576 = vunpack.c.h.b16 %v177
    %v577 = vunpack.c.l.b16 %v178
    %v578 = vunpack.c.h.b16 %v178
    %v579 = vunpack.c.l.b16 %v179
    %v580 = vunpack.c.h.b16 %v179
    %v581 = vunpack.c.l.b16 %v180
    %v582 = vunpack.c.h.b16 %v180
    %v583 = vunpack.c.l.b16 %v181
    %v584 = vunpack.c.h.b16 %v181
    %v585 = vunpack.c.l.b16 %v182
    %v586 = vunpack.c.h.b16 %v182
    %v587 = vunpack.c.l.b16 %v183
    %v588 = vunpack.c.h.b16 %v183
    %v589 = vunpack.c.l.b16 %v184
    %v590 = vunpack.c.h.b16 %v184
    %v591 = vunpack.c.l.b16 %v185
    %v592 = vunpack.c.h.b16 %v185
    %v593 = vunpack.c.l.b16 %v186
    %v594 = vunpack.c.h.b16 %v186
    %v595 = vunpack.c.l.b16 %v187
    %v596 = vunpack.c.h.b16 %v187
    %v597 = vunpack.c.l.b16 %v188
    %v598 = vunpack.c.h.b16 %v188
    %v599 = vunpack.c.l.b16 %v189
    %v600 = vunpack.c.h.b16 %v189
    %v601 = vunpack.c.l.b16 %v190
    %v602 = vunpack.c.h.b16 %v190
    %v603 = vunpack.c.l.b16 %v191
    %v604 = vunpack.c.h.b16 %v191
    %v605 = vunpack.c.l.b16 %v192
    %v606 = vunpack.c.h.b16 %v192
    %v607 = vunpack.c.l.b16 %v193
    %v608 = vunpack.c.h.b16 %v193
    %v609 = vunpack.c.l.b16 %v194
    %v610 = vunpack.c.h.b16 %v194
    %v611 = vunpack.c.l.b16 %v195
    %v612 = vunpack.c.h.b16 %v195
    %v613 = vunpack.c.l.b16 %v196
    %v614 = vunpack.c.h.b16 %v196
    %v615 = vunpack.c.l.b16 %v197
    %v616 = vunpack.c.h.b16 %v197
    %v617 = vunpack.c.l.b16 %v198
    %v618 = vunpack.c.h.b16 %v198
    %v619 = vunpack.c.l.b16 %v199
    %v620 = vunpack.c.h.b16 %v199
    %v621 = vunpack.c.l.b16 %v200
    %v622 = vunpack.c.h.b16 %v200
    %v623 = vunpack.c.l.b16 %v201
    %v624 = vunpack.c.h.b16 %v201
    %v625 = vunpack.c.l.b16 %v202
    %v626 = vunpack.c.h.b16 %v202
    %v627 = vunpack.c.l.b16 %v203
    %v628 = vunpack.c.h.b16 %v203
    %v629 = vunpack.c.l.b16 %v204
    %v630 = vunpack.c.h.b16 %v204
    %v631 = vunpack.c.l.b16 %v205
    %v632 = vunpack.c.h.b16 %v205
    %v633 = vunpack.c.l.b16 %v206
    %v634 = vunpack.c.h.b16 %v206
    %v635 = vunpack.c.l.b16 %v207
    %v636 = vunpack.c.h.b16 %v207
    %v637 = vunpack.c.l.b16 %v208
    %v638 = vunpack.c.h.b16 %v208
    %v639 = vunpack.c.l.b16 %v209
    %v640 = vunpack.c.h.b16 %v209
    %v641 = vunpack.c.l.b16 %v210
    %v642 = vunpack.c.h.b16 %v210
    %v643 = vunpack.c.l.b16 %v211
    %v644 = vunpack.c.h.b16 %v211
    %v645 = vunpack.c.l.b16 %v212
    %v646 = vunpack.c.h.b16 %v212
    %v647 = vunpack.c.l.b16 %v213
    %v648 = vunpack.c.h.b16 %v213
    %v649 = vunpack.c.l.b16 %v214
    %v650 = vunpack.c.h.b16 %v214
    %v651 = vpack.c.b16 %v397, %v395
    %v652 = vpack.c.b16 %v398, %v396
    %v653 = vpack.c.b16 %v401, %v399
    %v654 = vpack.c.b16 %v402, %v400
    %v655 = vpack.c.b16 %v405, %v403
    %v656 = vpack.c.b16 %v406, %v404
    %v657 = vpack.c.b16 %v409, %v407
    %v658 = vpack.c.b16 %v410, %v408
    %v659 = vpack.c.b16 %v413, %v411
    %v660 = vpack.c.b16 %v414, %v412
    %v661 = vpack.c.b16 %v417, %v415
    %v662 = vpack.c.b16 %v418, %v416
    %v663 = vpack.c.b16 %v421, %v419
    %v664 = vpack.c.b16 %v422, %v420
    %v665 = vpack.c.b16 %v425, %v423
    %v666 = vpack.c.b16 %v426, %v424
    %v667 = vpack.c.b16 %v429, %v427
    %v668 = vpack.c.b16 %v430, %v428
    %v669 = vpack.c.b16 %v433, %v431
    %v670 = vpack.c.b16 %v434, %v432
    %v671 = vpack.c.b16 %v437, %v435
    %v672 = vpack.c.b16 %v438, %v436
    %v673 = vpack.c.b16 %v441, %v439
    %v674 = vpack.c.b16 %v442, %v440
    %v675 = vpack.c.b16 %v445, %v443
    %v676 = vpack.c.b16 %v446, %v444
    %v677 = vpack.c.b16 %v449, %v447
    %v678 = vpack.c.b16 %v450, %v448
    %v679 = vpack.c.b16 %v453, %v451
    %v680 = vpack.c.b16 %v454, %v452
    %v681 = vpack.c.b16 %v457, %v455
    %v682 = vpack.c.b16 %v458, %v456
    %v683 = vpack.c.b16 %v461, %v459
    %v684 = vpack.c.b16 %v462, %v460
    %v685 = vpack.c.b16 %v465, %v463
    %v686 = vpack.c.b16 %v466, %v464
    %v687 = vpack.c.b16 %v469, %v467
    %v688 = vpack.c.b16 %v470, %v468
    %v689 = vpack.c.b16 %v473, %v471
    %v690 = vpack.c.b16 %v474, %v472
    %v691 = vpack.c.b16 %v477, %v475
    %v692 = vpack.c.b16 %v478, %v476
    %v693 = vpack.c.b16 %v481, %v479
    %v694 = vpack.c.b16 %v482, %v480
    %v695 = vpack.c.b16 %v485, %v483
    %v696 = vpack.c.b16 %v486, %v484
    %v697 = vpack.c.b16 %v489, %v487
    %v698 = vpack.c.b16 %v490, %v488
    %v699 = vpack.c.b16 %v493, %v491
    %v700 = vpack.c.b16 %v494, %v492
    %v701 = vpack.c.b16 %v497, %v495
    %v702 = vpack.c.b16 %v498, %v496
    %v703 = vpack.c.b16 %v501, %v499
    %v704 = vpack.c.b16 %v502, %v500
    %v705 = vpack.c.b16 %v505, %v503
    %v706 = vpack.c.b16 %v506, %v504
    %v707 = vpack.c.b16 %v509, %v507
    %v708 = vpack.c.b16 %v510, %v508
    %v709 = vpack.c.b16 %v513, %v511
    %v710 = vpack.c.b16 %v514, %v512
    %v711 = vpack.c.b16 %v517, %v515
    %v712 = vpack.c.b16 %v518, %v516
    %v713 = vpack.c.b16 %v521, %v519
    %v714 = vpack.c.b16 %v522, %v520
    %v715 = vpack.c.b16 %v525, %v523
    %v716 = vpack.c.b16 %v526, %v524
    %v717 = vpack.c.b16 %v529, %v527
    %v718 = vpack.c.b16 %v530, %v528
    %v719 = vpack.c.b16 %v533, %v531
    %v720 = vpack.c.b16 %v534, %v532
    %v721 = vpack.c.b16 %v537, %v535
    %v722 = vpack.c.b16 %v538, %v536
    %v723 = vpack.c.b16 %v541, %v539
    %v724 = vpack.c.b16 %v542, %v540
    %v725 = vpack.c.b16 %v545, %v543
    %v726 = vpack.c.b16 %v546, %v544
    %v727 = vpack.c.b16 %v549, %v547
    %v728 = vpack.c.b16 %v550, %v548
    %v729 = vpack.c.b16 %v553, %v551
    %v730 = vpack.c.b16 %v554, %v552
    %v731 = vpack.c.b16 %v557, %v555
    %v732 = vpack.c.b16 %v558, %v556
    %v733 = vpack.c.b16 %v561, %v559
    %v734 = vpack.c.b16 %v562, %v560
    %v735 = vpack.c.b16 %v565, %v563
    %v736 = vpack.c.b16 %v566, %v564
    %v737 = vpack.c.b16 %v569, %v567
    %v738 = vpack.c.b16 %v570, %v568
    %v739 = vpack.c.b16 %v573, %v571
    %v740 = vpack.c.b16 %v574, %v572
    %v741 = vpack.c.b16 %v577, %v575
    %v742 = vpack.c.b16 %v578, %v576
    %v743 = vpack.c.b16 %v581, %v579
    %v744 = vpack.c.b16 %v582, %v580
    %v745 = vpack.c.b16 %v585, %v583
    %v746 = vpack.c.b16 %v586, %v584
    %v747 = vpack.c.b16 %v589, %v587
    %v748 = vpack.c.b16 %v590, %v588
    %v749 = vpack.c.b16 %v593, %v591
    %v750 = vpack.c.b16 %v594, %v592
    %v751 = vpack.c.b16 %v597, %v595
    %v752 = vpack.c.b16 %v598, %v596
    %v753 = vpack.c.b16 %v601, %v599
    %v754 = vpack.c.b16 %v602, %v600
    %v755 = vpack.c.b16 %v605, %v603
    %v756 = vpack.c.b16 %v606, %v604
    %v757 = vpack.c.b16 %v609, %v607
    %v758 = vpack.c.b16 %v610, %v608
    %v759 = vpack.c.b16 %v613, %v611
    %v760 = vpack.c.b16 %v614, %v612
    %v761 = vpack.c.b16 %v617, %v615
    %v762 = vpack.c.b16 %v618, %v616
    %v763 = vpack.c.b16 %v621, %v619
    %v764 = vpack.c.b16 %v622, %v620
    %v765 = vpack.c.b16 %v625, %v623
    %v766 = vpack.c.b16 %v626, %v624
    %v767 = vpack.c.b16 %v629, %v627
    %v768 = vpack.c.b16 %v630, %v628
    %v769 = vpack.c.b16 %v633, %v631
    %v770 = vpack.c.b16 %v634, %v632
    %v771 = vpack.c.b16 %v637, %v635
    %v772 = vpack.c.b16 %v638, %v636
    %v773 = vpack.c.b16 %v641, %v639
    %v774 = vpack.c.b16 %v642, %v640
    %v775 = vpack.c.b16 %v645, %v643
    %v776 = vpack.c.b16 %v646, %v644
    %v777 = vpack.c.b16 %v649, %v647
    %v778 = vpack.c.b16 %v650, %v648
    %907 = vmatprep.subr.bf16.mxu0 %v652
    %908 = vmatpush1.bf16.msra.mxu0 %v651
    %909 = vmatprep.subr.bf16.mxu0 %v654
    %910 = vmatpush1.bf16.msra.mxu0 %v653
    %911 = vmatprep.subr.bf16.mxu0 %v656
    %912 = vmatpush1.bf16.msra.mxu0 %v655
    %913 = vmatprep.subr.bf16.mxu0 %v658
    %914 = vmatpush1.bf16.msra.mxu0 %v657
    %915 = vmatprep.subr.bf16.mxu0 %v660
    %916 = vmatpush1.bf16.msra.mxu0 %v659
    %917 = vmatprep.subr.bf16.mxu0 %v662
    %918 = vmatpush1.bf16.msra.mxu0 %v661
    %919 = vmatprep.subr.bf16.mxu0 %v664
    %920 = vmatpush1.bf16.msra.mxu0 %v663
    %921 = vmatprep.subr.bf16.mxu0 %v666
    %922 = vmatpush1.bf16.msra.mxu0 %v665
    %923 = vmatprep.subr.bf16.mxu0 %v668
    %924 = vmatpush1.bf16.msra.mxu0 %v667
    %925 = vmatprep.subr.bf16.mxu0 %v670
    %926 = vmatpush1.bf16.msra.mxu0 %v669
    %927 = vmatprep.subr.bf16.mxu0 %v672
    %928 = vmatpush1.bf16.msra.mxu0 %v671
    %929 = vmatprep.subr.bf16.mxu0 %v674
    %930 = vmatpush1.bf16.msra.mxu0 %v673
    %931 = vmatprep.subr.bf16.mxu0 %v676
    %932 = vmatpush1.bf16.msra.mxu0 %v675
    %933 = vmatprep.subr.bf16.mxu0 %v678
    %934 = vmatpush1.bf16.msra.mxu0 %v677
    %935 = vmatprep.subr.bf16.mxu0 %v680
    %936 = vmatpush1.bf16.msra.mxu0 %v679
    %937 = vmatprep.subr.bf16.mxu0 %v682
    %938 = vmatpush1.bf16.msra.mxu0 %v681
    %939 = vmatprep.mubr.bf16.mxu0 %v252
    %940 = vmatmul.mubr.bf16.gmra.mrb[0].mxu0 %v251
    %v941 = vpop.f32.mrb[0].mxu0
    %v942 = vadd.f32 %v220, %v941
    %v943 = vpop.f32.mrb[0].mxu0
    %v944 = vadd.f32 %v224, %v943
    %v945 = vpop.f32.mrb[0].mxu0
    %v946 = vadd.f32 %v220, %v945
    %v947 = vpop.f32.mrb[0].mxu0
    %v948 = vadd.f32 %v224, %v947
    %949 = vdwg.mxu0
    %950 = vmatprep.subr.bf16.mxu0 %v684
    %951 = vmatpush1.bf16.msra.mxu0 %v683
    %952 = vmatprep.subr.bf16.mxu0 %v686
    %953 = vmatpush1.bf16.msra.mxu0 %v685
    %954 = vmatprep.subr.bf16.mxu0 %v688
    %955 = vmatpush1.bf16.msra.mxu0 %v687
    %956 = vmatprep.subr.bf16.mxu0 %v690
    %957 = vmatpush1.bf16.msra.mxu0 %v689
    %958 = vmatprep.subr.bf16.mxu0 %v692
    %959 = vmatpush1.bf16.msra.mxu0 %v691
    %960 = vmatprep.subr.bf16.mxu0 %v694
    %961 = vmatpush1.bf16.msra.mxu0 %v693
    %962 = vmatprep.subr.bf16.mxu0 %v696
    %963 = vmatpush1.bf16.msra.mxu0 %v695
    %964 = vmatprep.subr.bf16.mxu0 %v698
    %965 = vmatpush1.bf16.msra.mxu0 %v697
    %966 = vmatprep.subr.bf16.mxu0 %v700
    %967 = vmatpush1.bf16.msra.mxu0 %v699
    %968 = vmatprep.subr.bf16.mxu0 %v702
    %969 = vmatpush1.bf16.msra.mxu0 %v701
    %970 = vmatprep.subr.bf16.mxu0 %v704
    %971 = vmatpush1.bf16.msra.mxu0 %v703
    %972 = vmatprep.subr.bf16.mxu0 %v706
    %973 = vmatpush1.bf16.msra.mxu0 %v705
    %974 = vmatprep.subr.bf16.mxu0 %v708
    %975 = vmatpush1.bf16.msra.mxu0 %v707
    %976 = vmatprep.subr.bf16.mxu0 %v710
    %977 = vmatpush1.bf16.msra.mxu0 %v709
    %978 = vmatprep.subr.bf16.mxu0 %v712
    %979 = vmatpush1.bf16.msra.mxu0 %v711
    %980 = vmatprep.subr.bf16.mxu0 %v714
    %981 = vmatpush1.bf16.msra.mxu0 %v713
    %982 = vmatprep.mubr.bf16.mxu0 %v254
    %983 = vmatmul.mubr.bf16.gmra.mrb[0].mxu0 %v253
    %v984 = vpop.f32.mrb[0].mxu0
    %v985 = vadd.f32 %v942, %v984
    %v986 = vpop.f32.mrb[0].mxu0
    %v987 = vadd.f32 %v944, %v986
    %v988 = vpop.f32.mrb[0].mxu0
    %v989 = vadd.f32 %v946, %v988
    %v990 = vpop.f32.mrb[0].mxu0
    %v991 = vadd.f32 %v948, %v990
    %992 = vdwg.mxu0
    %993 = vmatprep.subr.bf16.mxu0 %v716
    %994 = vmatpush1.bf16.msra.mxu0 %v715
    %995 = vmatprep.subr.bf16.mxu0 %v718
    %996 = vmatpush1.bf16.msra.mxu0 %v717
    %997 = vmatprep.subr.bf16.mxu0 %v720
    %998 = vmatpush1.bf16.msra.mxu0 %v719
    %999 = vmatprep.subr.bf16.mxu0 %v722
    %1000 = vmatpush1.bf16.msra.mxu0 %v721
    %1001 = vmatprep.subr.bf16.mxu0 %v724
    %1002 = vmatpush1.bf16.msra.mxu0 %v723
    %1003 = vmatprep.subr.bf16.mxu0 %v726
    %1004 = vmatpush1.bf16.msra.mxu0 %v725
    %1005 = vmatprep.subr.bf16.mxu0 %v728
    %1006 = vmatpush1.bf16.msra.mxu0 %v727
    %1007 = vmatprep.subr.bf16.mxu0 %v730
    %1008 = vmatpush1.bf16.msra.mxu0 %v729
    %1009 = vmatprep.subr.bf16.mxu0 %v732
    %1010 = vmatpush1.bf16.msra.mxu0 %v731
    %1011 = vmatprep.subr.bf16.mxu0 %v734
    %1012 = vmatpush1.bf16.msra.mxu0 %v733
    %1013 = vmatprep.subr.bf16.mxu0 %v736
    %1014 = vmatpush1.bf16.msra.mxu0 %v735
    %1015 = vmatprep.subr.bf16.mxu0 %v738
    %1016 = vmatpush1.bf16.msra.mxu0 %v737
    %1017 = vmatprep.subr.bf16.mxu0 %v740
    %1018 = vmatpush1.bf16.msra.mxu0 %v739
    %1019 = vmatprep.subr.bf16.mxu0 %v742
    %1020 = vmatpush1.bf16.msra.mxu0 %v741
    %1021 = vmatprep.subr.bf16.mxu0 %v744
    %1022 = vmatpush1.bf16.msra.mxu0 %v743
    %1023 = vmatprep.subr.bf16.mxu0 %v746
    %1024 = vmatpush1.bf16.msra.mxu0 %v745
    %1025 = vmatprep.mubr.bf16.mxu0 %v256
    %1026 = vmatmul.mubr.bf16.gmra.mrb[0].mxu0 %v255
    %v1027 = vpop.f32.mrb[0].mxu0
    %v1028 = vadd.f32 %v985, %v1027
    %v1029 = vpop.f32.mrb[0].mxu0
    %v1030 = vadd.f32 %v987, %v1029
    %v1031 = vpop.f32.mrb[0].mxu0
    %v1032 = vadd.f32 %v989, %v1031
    %v1033 = vpop.f32.mrb[0].mxu0
    %v1034 = vadd.f32 %v991, %v1033
    %1035 = vdwg.mxu0
    %1036 = vmatprep.subr.bf16.mxu0 %v748
    %1037 = vmatpush1.bf16.msra.mxu0 %v747
    %1038 = vmatprep.subr.bf16.mxu0 %v750
    %1039 = vmatpush1.bf16.msra.mxu0 %v749
    %1040 = vmatprep.subr.bf16.mxu0 %v752
    %1041 = vmatpush1.bf16.msra.mxu0 %v751
    %1042 = vmatprep.subr.bf16.mxu0 %v754
    %1043 = vmatpush1.bf16.msra.mxu0 %v753
    %1044 = vmatprep.subr.bf16.mxu0 %v756
    %1045 = vmatpush1.bf16.msra.mxu0 %v755
    %1046 = vmatprep.subr.bf16.mxu0 %v758
    %1047 = vmatpush1.bf16.msra.mxu0 %v757
    %1048 = vmatprep.subr.bf16.mxu0 %v760
    %1049 = vmatpush1.bf16.msra.mxu0 %v759
    %1050 = vmatprep.subr.bf16.mxu0 %v762
    %1051 = vmatpush1.bf16.msra.mxu0 %v761
    %1052 = vmatprep.subr.bf16.mxu0 %v764
    %1053 = vmatpush1.bf16.msra.mxu0 %v763
    %1054 = vmatprep.subr.bf16.mxu0 %v766
    %1055 = vmatpush1.bf16.msra.mxu0 %v765
    %1056 = vmatprep.subr.bf16.mxu0 %v768
    %1057 = vmatpush1.bf16.msra.mxu0 %v767
    %1058 = vmatprep.subr.bf16.mxu0 %v770
    %1059 = vmatpush1.bf16.msra.mxu0 %v769
    %1060 = vmatprep.subr.bf16.mxu0 %v772
    %1061 = vmatpush1.bf16.msra.mxu0 %v771
    %1062 = vmatprep.subr.bf16.mxu0 %v774
    %1063 = vmatpush1.bf16.msra.mxu0 %v773
    %1064 = vmatprep.subr.bf16.mxu0 %v776
    %1065 = vmatpush1.bf16.msra.mxu0 %v775
    %1066 = vmatprep.subr.bf16.mxu0 %v778
    %1067 = vmatpush1.bf16.msra.mxu0 %v777
    %1068 = vmatprep.mubr.bf16.mxu0 %v258
    %1069 = vmatmul.mubr.bf16.gmra.mrb[0].mxu0 %v257
    %v1070 = vpop.f32.mrb[0].mxu0
    %v1071 = vadd.f32 %v1028, %v1070
    %v1072 = vpop.f32.mrb[0].mxu0
    %v1073 = vadd.f32 %v1030, %v1072
    %v1074 = vpop.f32.mrb[0].mxu0
    %v1075 = vadd.f32 %v1032, %v1074
    %v1076 = vpop.f32.mrb[0].mxu0
    %v1077 = vadd.f32 %v1034, %v1076
    %1078 = vdwg.mxu0
    %v1079 = vmax.f32 %v1071, 0.0
    %v1080 = vmax.f32 %v1073, 0.0
    %v1081 = vmax.f32 %v1075, 0.0
    %v1082 = vmax.f32 %v1077, 0.0
    %v1083 = vpack.c.bf16 %v1081, %v1079
    %v1084 = vpack.c.bf16 %v1082, %v1080
    %v1085 = vld [vmem:[%s4] sm:$0xff]
    %v1086 = vld [vmem:[%s4 + $0x8] sm:$0xff]
    %v1087 = vld [vmem:[%s4 + $0x10] sm:$0xff]
    %v1088 = vld [vmem:[%s4 + $0x18] sm:$0xff]
    %v1089 = vld [vmem:[%s4 + $0x20] sm:$0xff]
    %v1090 = vld [vmem:[%s4 + $0x28] sm:$0xff]
    %v1091 = vld [vmem:[%s4 + $0x30] sm:$0xff]
    %v1092 = vld [vmem:[%s4 + $0x38] sm:$0xff]
    %v1093 = vld [vmem:[%s4 + $0x40] sm:$0xff]
    %v1094 = vld [vmem:[%s4 + $0x48] sm:$0xff]
    %v1095 = vld [vmem:[%s4 + $0x50] sm:$0xff]
    %v1096 = vld [vmem:[%s4 + $0x58] sm:$0xff]
    %v1097 = vld [vmem:[%s4 + $0x60] sm:$0xff]
    %v1098 = vld [vmem:[%s4 + $0x68] sm:$0xff]
    %v1099 = vld [vmem:[%s4 + $0x70] sm:$0xff]
    %v1100 = vld [vmem:[%s4 + $0x78] sm:$0xff]
    %v1101 = vld [vmem:[%s4 + $0x80] sm:$0xff]
    %v1102 = vld [vmem:[%s4 + $0x88] sm:$0xff]
    %v1103 = vld [vmem:[%s4 + $0x90] sm:$0xff]
    %v1104 = vld [vmem:[%s4 + $0x98] sm:$0xff]
    %v1105 = vld [vmem:[%s4 + $0xa0] sm:$0xff]
    %v1106 = vld [vmem:[%s4 + $0xa8] sm:$0xff]
    %v1107 = vld [vmem:[%s4 + $0xb0] sm:$0xff]
    %v1108 = vld [vmem:[%s4 + $0xb8] sm:$0xff]
    %v1109 = vld [vmem:[%s4 + $0xc0] sm:$0xff]
    %v1110 = vld [vmem:[%s4 + $0xc8] sm:$0xff]
    %v1111 = vld [vmem:[%s4 + $0xd0] sm:$0xff]
    %v1112 = vld [vmem:[%s4 + $0xd8] sm:$0xff]
    %v1113 = vld [vmem:[%s4 + $0xe0] sm:$0xff]
    %v1114 = vld [vmem:[%s4 + $0xe8] sm:$0xff]
    %v1115 = vld [vmem:[%s4 + $0xf0] sm:$0xff]
    %v1116 = vld [vmem:[%s4 + $0xf8] sm:$0xff]
    %v1117 = vld [vmem:[%s5] sm:$0x3]
    %v1119 = vlaneseq
    %v1120 = vshrl.u32 %v1119, 7
    %v1121 = vsub.s32 0, %v1120
    %v1122 = vrot.slane %v1117, %v1121
    %v1123 = vlaneseq
    %v1124 = vshrl.u32 %v1123, 7
    %v1125 = vsub.s32 1, %v1124
    %v1126 = vrot.slane %v1117, %v1125
    %v1161 = vunpack.c.l.b16 %v1085
    %v1162 = vunpack.c.h.b16 %v1085
    %v1163 = vunpack.c.l.b16 %v1086
    %v1164 = vunpack.c.h.b16 %v1086
    %v1165 = vunpack.c.l.b16 %v1087
    %v1166 = vunpack.c.h.b16 %v1087
    %v1167 = vunpack.c.l.b16 %v1088
    %v1168 = vunpack.c.h.b16 %v1088
    %v1169 = vunpack.c.l.b16 %v1089
    %v1170 = vunpack.c.h.b16 %v1089
    %v1171 = vunpack.c.l.b16 %v1090
    %v1172 = vunpack.c.h.b16 %v1090
    %v1173 = vunpack.c.l.b16 %v1091
    %v1174 = vunpack.c.h.b16 %v1091
    %v1175 = vunpack.c.l.b16 %v1092
    %v1176 = vunpack.c.h.b16 %v1092
    %v1177 = vunpack.c.l.b16 %v1093
    %v1178 = vunpack.c.h.b16 %v1093
    %v1179 = vunpack.c.l.b16 %v1094
    %v1180 = vunpack.c.h.b16 %v1094
    %v1181 = vunpack.c.l.b16 %v1095
    %v1182 = vunpack.c.h.b16 %v1095
    %v1183 = vunpack.c.l.b16 %v1096
    %v1184 = vunpack.c.h.b16 %v1096
    %v1185 = vunpack.c.l.b16 %v1097
    %v1186 = vunpack.c.h.b16 %v1097
    %v1187 = vunpack.c.l.b16 %v1098
    %v1188 = vunpack.c.h.b16 %v1098
    %v1189 = vunpack.c.l.b16 %v1099
    %v1190 = vunpack.c.h.b16 %v1099
    %v1191 = vunpack.c.l.b16 %v1100
    %v1192 = vunpack.c.h.b16 %v1100
    %v1193 = vunpack.c.l.b16 %v1101
    %v1194 = vunpack.c.h.b16 %v1101
    %v1195 = vunpack.c.l.b16 %v1102
    %v1196 = vunpack.c.h.b16 %v1102
    %v1197 = vunpack.c.l.b16 %v1103
    %v1198 = vunpack.c.h.b16 %v1103
    %v1199 = vunpack.c.l.b16 %v1104
    %v1200 = vunpack.c.h.b16 %v1104
    %v1201 = vunpack.c.l.b16 %v1105
    %v1202 = vunpack.c.h.b16 %v1105
    %v1203 = vunpack.c.l.b16 %v1106
    %v1204 = vunpack.c.h.b16 %v1106
    %v1205 = vunpack.c.l.b16 %v1107
    %v1206 = vunpack.c.h.b16 %v1107
    %v1207 = vunpack.c.l.b16 %v1108
    %v1208 = vunpack.c.h.b16 %v1108
    %v1209 = vunpack.c.l.b16 %v1109
    %v1210 = vunpack.c.h.b16 %v1109
    %v1211 = vunpack.c.l.b16 %v1110
    %v1212 = vunpack.c.h.b16 %v1110
    %v1213 = vunpack.c.l.b16 %v1111
    %v1214 = vunpack.c.h.b16 %v1111
    %v1215 = vunpack.c.l.b16 %v1112
    %v1216 = vunpack.c.h.b16 %v1112
    %v1217 = vunpack.c.l.b16 %v1113
    %v1218 = vunpack.c.h.b16 %v1113
    %v1219 = vunpack.c.l.b16 %v1114
    %v1220 = vunpack.c.h.b16 %v1114
    %v1221 = vunpack.c.l.b16 %v1115
    %v1222 = vunpack.c.h.b16 %v1115
    %v1223 = vunpack.c.l.b16 %v1116
    %v1224 = vunpack.c.h.b16 %v1116
    %v1225 = vpack.c.b16 %v1163, %v1161
    %v1226 = vpack.c.b16 %v1164, %v1162
    %v1227 = vpack.c.b16 %v1167, %v1165
    %v1228 = vpack.c.b16 %v1168, %v1166
    %v1229 = vpack.c.b16 %v1171, %v1169
    %v1230 = vpack.c.b16 %v1172, %v1170
    %v1231 = vpack.c.b16 %v1175, %v1173
    %v1232 = vpack.c.b16 %v1176, %v1174
    %v1233 = vpack.c.b16 %v1179, %v1177
    %v1234 = vpack.c.b16 %v1180, %v1178
    %v1235 = vpack.c.b16 %v1183, %v1181
    %v1236 = vpack.c.b16 %v1184, %v1182
    %v1237 = vpack.c.b16 %v1187, %v1185
    %v1238 = vpack.c.b16 %v1188, %v1186
    %v1239 = vpack.c.b16 %v1191, %v1189
    %v1240 = vpack.c.b16 %v1192, %v1190
    %v1241 = vpack.c.b16 %v1195, %v1193
    %v1242 = vpack.c.b16 %v1196, %v1194
    %v1243 = vpack.c.b16 %v1199, %v1197
    %v1244 = vpack.c.b16 %v1200, %v1198
    %v1245 = vpack.c.b16 %v1203, %v1201
    %v1246 = vpack.c.b16 %v1204, %v1202
    %v1247 = vpack.c.b16 %v1207, %v1205
    %v1248 = vpack.c.b16 %v1208, %v1206
    %v1249 = vpack.c.b16 %v1211, %v1209
    %v1250 = vpack.c.b16 %v1212, %v1210
    %v1251 = vpack.c.b16 %v1215, %v1213
    %v1252 = vpack.c.b16 %v1216, %v1214
    %v1253 = vpack.c.b16 %v1219, %v1217
    %v1254 = vpack.c.b16 %v1220, %v1218
    %v1255 = vpack.c.b16 %v1223, %v1221
    %v1256 = vpack.c.b16 %v1224, %v1222
    %1289 = vmatprep.subr.bf16.mxu0 %v1226
    %1290 = vmatpush1.bf16.msra.mxu0 %v1225
    %1291 = vmatprep.subr.bf16.mxu0 %v1228
    %1292 = vmatpush1.bf16.msra.mxu0 %v1227
    %1293 = vmatprep.subr.bf16.mxu0 %v1230
    %1294 = vmatpush1.bf16.msra.mxu0 %v1229
    %1295 = vmatprep.subr.bf16.mxu0 %v1232
    %1296 = vmatpush1.bf16.msra.mxu0 %v1231
    %1297 = vmatprep.subr.bf16.mxu0 %v1234
    %1298 = vmatpush1.bf16.msra.mxu0 %v1233
    %1299 = vmatprep.subr.bf16.mxu0 %v1236
    %1300 = vmatpush1.bf16.msra.mxu0 %v1235
    %1301 = vmatprep.subr.bf16.mxu0 %v1238
    %1302 = vmatpush1.bf16.msra.mxu0 %v1237
    %1303 = vmatprep.subr.bf16.mxu0 %v1240
    %1304 = vmatpush1.bf16.msra.mxu0 %v1239
    %1305 = vmatprep.subr.bf16.mxu0 %v1242
    %1306 = vmatpush1.bf16.msra.mxu0 %v1241
    %1307 = vmatprep.subr.bf16.mxu0 %v1244
    %1308 = vmatpush1.bf16.msra.mxu0 %v1243
    %1309 = vmatprep.subr.bf16.mxu0 %v1246
    %1310 = vmatpush1.bf16.msra.mxu0 %v1245
    %1311 = vmatprep.subr.bf16.mxu0 %v1248
    %1312 = vmatpush1.bf16.msra.mxu0 %v1247
    %1313 = vmatprep.subr.bf16.mxu0 %v1250
    %1314 = vmatpush1.bf16.msra.mxu0 %v1249
    %1315 = vmatprep.subr.bf16.mxu0 %v1252
    %1316 = vmatpush1.bf16.msra.mxu0 %v1251
    %1317 = vmatprep.subr.bf16.mxu0 %v1254
    %1318 = vmatpush1.bf16.msra.mxu0 %v1253
    %1319 = vmatprep.subr.bf16.mxu0 %v1256
    %1320 = vmatpush1.bf16.msra.mxu0 %v1255
    %1321 = vmatprep.mubr.bf16.mxu0 %v1084
    %1322 = vmatmul.mubr.bf16.gmra.mrb[0].mxu0 %v1083
    %v1323 = vpop.f32.mrb[0].mxu0
    %v1324 = vadd.f32 %v1122, %v1323
    %v1325 = vpop.f32.mrb[0].mxu0
    %v1326 = vadd.f32 %v1126, %v1325
    %v1327 = vpop.f32.mrb[0].mxu0
    %v1328 = vadd.f32 %v1122, %v1327
    %v1329 = vpop.f32.mrb[0].mxu0
    %v1330 = vadd.f32 %v1126, %v1329
    %1331 = vdwg.mxu0
    %1332 = vst [vmem:[%s10] sm:$0xff] %v1324
    %1333 = vst [vmem:[%s10 + $0x8] sm:$0xff] %v1326
    %1334 = vst [vmem:[%s10 + $0x10] sm:$0xff] %v1328
    %1335 = vst [vmem:[%s10 + $0x18] sm:$0xff] %v1330
    %v1336 = vmul.f32 %v1326, 1.442695
    %v1337 = vpow.pop %v1336
    %v1338 = vmul.f32 %v1330, 1.442695
    %v1339 = vpow.pop %v1338
    %v1340 = vld [vmem:[%s1] sm:$0xff]
    %v1341 = vld [vmem:[%s1 + $0x8] sm:$0xff]
    %v1342 = vmul.f32 %v1337, %v1340
    %v1343 = vmul.f32 %v1339, %v1341
    %v1344 = vadd.f32 %v1324, %v1342
    %v1345 = vadd.f32 %v1328, %v1343
    %v1346 = vpack.c.bf16 %v1345, %v1344
    %v1347 = vld [vmem:[#allocation4] sm:$0xff]
    %v1348 = vld [vmem:[#allocation4 + $0x8] sm:$0xff]
    %v1349 = vld [vmem:[#allocation4 + $0x10] sm:$0xff]
    %v1350 = vld [vmem:[#allocation4 + $0x18] sm:$0xff]
    %v1351 = vld [vmem:[#allocation4 + $0x20] sm:$0xff]
    %v1352 = vld [vmem:[#allocation4 + $0x28] sm:$0xff]
    %v1353 = vld [vmem:[#allocation4 + $0x30] sm:$0xff]
    %v1354 = vld [vmem:[#allocation4 + $0x38] sm:$0xff]
    %v1355 = vld [vmem:[#allocation4 + $0x40] sm:$0xff]
    %v1356 = vld [vmem:[#allocation4 + $0x48] sm:$0xff]
    %v1357 = vld [vmem:[#allocation4 + $0x50] sm:$0xff]
    %v1358 = vld [vmem:[#allocation4 + $0x58] sm:$0xff]
    %v1359 = vld [vmem:[#allocation4 + $0x60] sm:$0xff]
    %v1360 = vld [vmem:[#allocation4 + $0x68] sm:$0xff]
    %v1361 = vld [vmem:[#allocation4 + $0x70] sm:$0xff]
    %v1362 = vld [vmem:[#allocation4 + $0x78] sm:$0xff]
    %v1363 = vld [vmem:[%s7] sm:$0x3]
    %v1365 = vlaneseq
    %v1366 = vshrl.u32 %v1365, 7
    %v1367 = vsub.s32 0, %v1366
    %v1368 = vrot.slane %v1363, %v1367
    %v1369 = vlaneseq
    %v1370 = vshrl.u32 %v1369, 7
    %v1371 = vsub.s32 1, %v1370
    %v1372 = vrot.slane %v1363, %v1371
    %v1391 = vunpack.c.l.b16 %v1347
    %v1392 = vunpack.c.h.b16 %v1347
    %v1393 = vunpack.c.l.b16 %v1348
    %v1394 = vunpack.c.h.b16 %v1348
    %v1395 = vunpack.c.l.b16 %v1349
    %v1396 = vunpack.c.h.b16 %v1349
    %v1397 = vunpack.c.l.b16 %v1350
    %v1398 = vunpack.c.h.b16 %v1350
    %v1399 = vunpack.c.l.b16 %v1351
    %v1400 = vunpack.c.h.b16 %v1351
    %v1401 = vunpack.c.l.b16 %v1352
    %v1402 = vunpack.c.h.b16 %v1352
    %v1403 = vunpack.c.l.b16 %v1353
    %v1404 = vunpack.c.h.b16 %v1353
    %v1405 = vunpack.c.l.b16 %v1354
    %v1406 = vunpack.c.h.b16 %v1354
    %v1407 = vunpack.c.l.b16 %v1355
    %v1408 = vunpack.c.h.b16 %v1355
    %v1409 = vunpack.c.l.b16 %v1356
    %v1410 = vunpack.c.h.b16 %v1356
    %v1411 = vunpack.c.l.b16 %v1357
    %v1412 = vunpack.c.h.b16 %v1357
    %v1413 = vunpack.c.l.b16 %v1358
    %v1414 = vunpack.c.h.b16 %v1358
    %v1415 = vunpack.c.l.b16 %v1359
    %v1416 = vunpack.c.h.b16 %v1359
    %v1417 = vunpack.c.l.b16 %v1360
    %v1418 = vunpack.c.h.b16 %v1360
    %v1419 = vunpack.c.l.b16 %v1361
    %v1420 = vunpack.c.h.b16 %v1361
    %v1421 = vunpack.c.l.b16 %v1362
    %v1422 = vunpack.c.h.b16 %v1362
    %v1423 = vpack.c.b16 %v1393, %v1391
    %v1424 = vpack.c.b16 %v1394, %v1392
    %v1425 = vpack.c.b16 %v1397, %v1395
    %v1426 = vpack.c.b16 %v1398, %v1396
    %v1427 = vpack.c.b16 %v1401, %v1399
    %v1428 = vpack.c.b16 %v1402, %v1400
    %v1429 = vpack.c.b16 %v1405, %v1403
    %v1430 = vpack.c.b16 %v1406, %v1404
    %v1431 = vpack.c.b16 %v1409, %v1407
    %v1432 = vpack.c.b16 %v1410, %v1408
    %v1433 = vpack.c.b16 %v1413, %v1411
    %v1434 = vpack.c.b16 %v1414, %v1412
    %v1435 = vpack.c.b16 %v1417, %v1415
    %v1436 = vpack.c.b16 %v1418, %v1416
    %v1437 = vpack.c.b16 %v1421, %v1419
    %v1438 = vpack.c.b16 %v1422, %v1420
    %1455 = vmatprep.subr.bf16.mxu0 %v1424
    %1456 = vmatpush1.bf16.msra.mxu0 %v1423
    %1457 = vmatprep.subr.bf16.mxu0 %v1426
    %1458 = vmatpush1.bf16.msra.mxu0 %v1425
    %1459 = vmatprep.subr.bf16.mxu0 %v1428
    %1460 = vmatpush1.bf16.msra.mxu0 %v1427
    %1461 = vmatprep.subr.bf16.mxu0 %v1430
    %1462 = vmatpush1.bf16.msra.mxu0 %v1429
    %1463 = vmatprep.subr.bf16.mxu0 %v1432
    %1464 = vmatpush1.bf16.msra.mxu0 %v1431
    %1465 = vmatprep.subr.bf16.mxu0 %v1434
    %1466 = vmatpush1.bf16.msra.mxu0 %v1433
    %1467 = vmatprep.subr.bf16.mxu0 %v1436
    %1468 = vmatpush1.bf16.msra.mxu0 %v1435
    %1469 = vmatprep.subr.bf16.mxu0 %v1438
    %1470 = vmatpush1.bf16.msra.mxu0 %v1437
    %1471 = vmatprep.subr.bf16.mxu0 0
    %1472 = vmatpush1.bf16.msra.mxu0 0
    %1473 = vmatprep.subr.bf16.mxu0 0
    %1474 = vmatpush1.bf16.msra.mxu0 0
    %1475 = vmatprep.subr.bf16.mxu0 0
    %1476 = vmatpush1.bf16.msra.mxu0 0
    %1477 = vmatprep.subr.bf16.mxu0 0
    %1478 = vmatpush1.bf16.msra.mxu0 0
    %1479 = vmatprep.subr.bf16.mxu0 0
    %1480 = vmatpush1.bf16.msra.mxu0 0
    %1481 = vmatprep.subr.bf16.mxu0 0
    %1482 = vmatpush1.bf16.msra.mxu0 0
    %1483 = vmatprep.subr.bf16.mxu0 0
    %1484 = vmatpush1.bf16.msra.mxu0 0
    %1485 = vmatprep.subr.bf16.mxu0 0
    %1486 = vmatpush1.bf16.msra.mxu0 0
    %1487 = vmatprep.mubr.bf16.mxu0 0
    %1488 = vmatmul.mubr.bf16.gmra.mrb[0].mxu0 %v1346
    %v1489 = vpop.f32.mrb[0].mxu0
    %v1490 = vadd.f32 %v1368, %v1489
    %v1491 = vpop.f32.mrb[0].mxu0
    %v1492 = vadd.f32 %v1372, %v1491
    %v1493 = vpop.f32.mrb[0].mxu0
    %v1494 = vadd.f32 %v1368, %v1493
    %v1495 = vpop.f32.mrb[0].mxu0
    %v1496 = vadd.f32 %v1372, %v1495
    %1497 = vdwg.mxu0
    %v1498 = vmax.f32 %v1490, 0.0
    %v1499 = vmax.f32 %v1492, 0.0
    %v1500 = vmax.f32 %v1494, 0.0
    %v1501 = vmax.f32 %v1496, 0.0
    %v1502 = vpack.c.bf16 %v1500, %v1498
    %v1503 = vpack.c.bf16 %v1501, %v1499
    %v1504 = vld [vmem:[#allocation6] sm:$0xff]
    %v1505 = vld [vmem:[#allocation6 + $0x8] sm:$0xff]
    %v1506 = vld [vmem:[#allocation6 + $0x10] sm:$0xff]
    %v1507 = vld [vmem:[#allocation6 + $0x18] sm:$0xff]
    %v1508 = vld [vmem:[#allocation6 + $0x20] sm:$0xff]
    %v1509 = vld [vmem:[#allocation6 + $0x28] sm:$0xff]
    %v1510 = vld [vmem:[#allocation6 + $0x30] sm:$0xff]
    %v1511 = vld [vmem:[#allocation6 + $0x38] sm:$0xff]
    %v1512 = vld [vmem:[#allocation6 + $0x40] sm:$0xff]
    %v1513 = vld [vmem:[#allocation6 + $0x48] sm:$0xff]
    %v1514 = vld [vmem:[#allocation6 + $0x50] sm:$0xff]
    %v1515 = vld [vmem:[#allocation6 + $0x58] sm:$0xff]
    %v1516 = vld [vmem:[#allocation6 + $0x60] sm:$0xff]
    %v1517 = vld [vmem:[#allocation6 + $0x68] sm:$0xff]
    %v1518 = vld [vmem:[#allocation6 + $0x70] sm:$0xff]
    %v1519 = vld [vmem:[#allocation6 + $0x78] sm:$0xff]
    %v1520 = vld [vmem:[#allocation6 + $0x80] sm:$0xff]
    %v1521 = vld [vmem:[#allocation6 + $0x88] sm:$0xff]
    %v1522 = vld [vmem:[#allocation6 + $0x90] sm:$0xff]
    %v1523 = vld [vmem:[#allocation6 + $0x98] sm:$0xff]
    %v1524 = vld [vmem:[#allocation6 + $0xa0] sm:$0xff]
    %v1525 = vld [vmem:[#allocation6 + $0xa8] sm:$0xff]
    %v1526 = vld [vmem:[#allocation6 + $0xb0] sm:$0xff]
    %v1527 = vld [vmem:[#allocation6 + $0xb8] sm:$0xff]
    %v1528 = vld [vmem:[#allocation6 + $0xc0] sm:$0xff]
    %v1529 = vld [vmem:[#allocation6 + $0xc8] sm:$0xff]
    %v1530 = vld [vmem:[#allocation6 + $0xd0] sm:$0xff]
    %v1531 = vld [vmem:[#allocation6 + $0xd8] sm:$0xff]
    %v1532 = vld [vmem:[#allocation6 + $0xe0] sm:$0xff]
    %v1533 = vld [vmem:[#allocation6 + $0xe8] sm:$0xff]
    %v1534 = vld [vmem:[#allocation6 + $0xf0] sm:$0xff]
    %v1535 = vld [vmem:[#allocation6 + $0xf8] sm:$0xff]
    %v1536 = vld [vmem:[#allocation6 + $0x100] sm:$0xff]
    %v1537 = vld [vmem:[#allocation6 + $0x108] sm:$0xff]
    %v1538 = vld [vmem:[#allocation6 + $0x110] sm:$0xff]
    %v1539 = vld [vmem:[#allocation6 + $0x118] sm:$0xff]
    %v1540 = vld [vmem:[#allocation6 + $0x120] sm:$0xff]
    %v1541 = vld [vmem:[#allocation6 + $0x128] sm:$0xff]
    %v1542 = vld [vmem:[#allocation6 + $0x130] sm:$0xff]
    %v1543 = vld [vmem:[#allocation6 + $0x138] sm:$0xff]
    %v1544 = vld [vmem:[#allocation6 + $0x140] sm:$0xff]
    %v1545 = vld [vmem:[#allocation6 + $0x148] sm:$0xff]
    %v1546 = vld [vmem:[#allocation6 + $0x150] sm:$0xff]
    %v1547 = vld [vmem:[#allocation6 + $0x158] sm:$0xff]
    %v1548 = vld [vmem:[#allocation6 + $0x160] sm:$0xff]
    %v1549 = vld [vmem:[#allocation6 + $0x168] sm:$0xff]
    %v1550 = vld [vmem:[#allocation6 + $0x170] sm:$0xff]
    %v1551 = vld [vmem:[#allocation6 + $0x178] sm:$0xff]
    %v1552 = vld [vmem:[#allocation6 + $0x180] sm:$0xff]
    %v1553 = vld [vmem:[#allocation6 + $0x188] sm:$0xff]
    %v1554 = vld [vmem:[#allocation6 + $0x190] sm:$0xff]
    %v1555 = vld [vmem:[#allocation6 + $0x198] sm:$0xff]
    %v1556 = vld [vmem:[#allocation6 + $0x1a0] sm:$0xff]
    %v1557 = vld [vmem:[#allocation6 + $0x1a8] sm:$0xff]
    %v1558 = vld [vmem:[#allocation6 + $0x1b0] sm:$0xff]
    %v1559 = vld [vmem:[#allocation6 + $0x1b8] sm:$0xff]
    %v1560 = vld [vmem:[#allocation6 + $0x1c0] sm:$0xff]
    %v1561 = vld [vmem:[#allocation6 + $0x1c8] sm:$0xff]
    %v1562 = vld [vmem:[#allocation6 + $0x1d0] sm:$0xff]
    %v1563 = vld [vmem:[#allocation6 + $0x1d8] sm:$0xff]
    %v1564 = vld [vmem:[#allocation6 + $0x1e0] sm:$0xff]
    %v1565 = vld [vmem:[#allocation6 + $0x1e8] sm:$0xff]
    %v1566 = vld [vmem:[#allocation6 + $0x1f0] sm:$0xff]
    %v1567 = vld [vmem:[#allocation6 + $0x1f8] sm:$0xff]
    %v1568 = vld [vmem:[#allocation6 + $0x200] sm:$0xff]
    %v1569 = vld [vmem:[#allocation6 + $0x208] sm:$0xff]
    %v1570 = vld [vmem:[#allocation6 + $0x210] sm:$0xff]
    %v1571 = vld [vmem:[#allocation6 + $0x218] sm:$0xff]
    %v1572 = vld [vmem:[#allocation6 + $0x220] sm:$0xff]
    %v1573 = vld [vmem:[#allocation6 + $0x228] sm:$0xff]
    %v1574 = vld [vmem:[#allocation6 + $0x230] sm:$0xff]
    %v1575 = vld [vmem:[#allocation6 + $0x238] sm:$0xff]
    %v1576 = vld [vmem:[#allocation6 + $0x240] sm:$0xff]
    %v1577 = vld [vmem:[#allocation6 + $0x248] sm:$0xff]
    %v1578 = vld [vmem:[#allocation6 + $0x250] sm:$0xff]
    %v1579 = vld [vmem:[#allocation6 + $0x258] sm:$0xff]
    %v1580 = vld [vmem:[#allocation6 + $0x260] sm:$0xff]
    %v1581 = vld [vmem:[#allocation6 + $0x268] sm:$0xff]
    %v1582 = vld [vmem:[#allocation6 + $0x270] sm:$0xff]
    %v1583 = vld [vmem:[#allocation6 + $0x278] sm:$0xff]
    %v1584 = vld [vmem:[#allocation6 + $0x280] sm:$0xff]
    %v1585 = vld [vmem:[#allocation6 + $0x288] sm:$0xff]
    %v1586 = vld [vmem:[#allocation6 + $0x290] sm:$0xff]
    %v1587 = vld [vmem:[#allocation6 + $0x298] sm:$0xff]
    %v1588 = vld [vmem:[#allocation6 + $0x2a0] sm:$0xff]
    %v1589 = vld [vmem:[#allocation6 + $0x2a8] sm:$0xff]
    %v1590 = vld [vmem:[#allocation6 + $0x2b0] sm:$0xff]
    %v1591 = vld [vmem:[#allocation6 + $0x2b8] sm:$0xff]
    %v1592 = vld [vmem:[#allocation6 + $0x2c0] sm:$0xff]
    %v1593 = vld [vmem:[#allocation6 + $0x2c8] sm:$0xff]
    %v1594 = vld [vmem:[#allocation6 + $0x2d0] sm:$0xff]
    %v1595 = vld [vmem:[#allocation6 + $0x2d8] sm:$0xff]
    %v1596 = vld [vmem:[#allocation6 + $0x2e0] sm:$0xff]
    %v1597 = vld [vmem:[#allocation6 + $0x2e8] sm:$0xff]
    %v1598 = vld [vmem:[#allocation6 + $0x2f0] sm:$0xff]
    %v1599 = vld [vmem:[#allocation6 + $0x2f8] sm:$0xff]
    %v1600 = vld [vmem:[#allocation6 + $0x300] sm:$0xff]
    %v1601 = vld [vmem:[#allocation6 + $0x308] sm:$0xff]
    %v1602 = vld [vmem:[#allocation6 + $0x310] sm:$0xff]
    %v1603 = vld [vmem:[#allocation6 + $0x318] sm:$0xff]
    %v1604 = vld [vmem:[#allocation6 + $0x320] sm:$0xff]
    %v1605 = vld [vmem:[#allocation6 + $0x328] sm:$0xff]
    %v1606 = vld [vmem:[#allocation6 + $0x330] sm:$0xff]
    %v1607 = vld [vmem:[#allocation6 + $0x338] sm:$0xff]
    %v1608 = vld [vmem:[#allocation6 + $0x340] sm:$0xff]
    %v1609 = vld [vmem:[#allocation6 + $0x348] sm:$0xff]
    %v1610 = vld [vmem:[#allocation6 + $0x350] sm:$0xff]
    %v1611 = vld [vmem:[#allocation6 + $0x358] sm:$0xff]
    %v1612 = vld [vmem:[#allocation6 + $0x360] sm:$0xff]
    %v1613 = vld [vmem:[#allocation6 + $0x368] sm:$0xff]
    %v1614 = vld [vmem:[#allocation6 + $0x370] sm:$0xff]
    %v1615 = vld [vmem:[#allocation6 + $0x378] sm:$0xff]
    %v1616 = vld [vmem:[#allocation6 + $0x380] sm:$0xff]
    %v1617 = vld [vmem:[#allocation6 + $0x388] sm:$0xff]
    %v1618 = vld [vmem:[#allocation6 + $0x390] sm:$0xff]
    %v1619 = vld [vmem:[#allocation6 + $0x398] sm:$0xff]
    %v1620 = vld [vmem:[#allocation6 + $0x3a0] sm:$0xff]
    %v1621 = vld [vmem:[#allocation6 + $0x3a8] sm:$0xff]
    %v1622 = vld [vmem:[#allocation6 + $0x3b0] sm:$0xff]
    %v1623 = vld [vmem:[#allocation6 + $0x3b8] sm:$0xff]
    %v1624 = vld [vmem:[#allocation6 + $0x3c0] sm:$0xff]
    %v1625 = vld [vmem:[#allocation6 + $0x3c8] sm:$0xff]
    %v1626 = vld [vmem:[#allocation6 + $0x3d0] sm:$0xff]
    %v1627 = vld [vmem:[#allocation6 + $0x3d8] sm:$0xff]
    %v1628 = vld [vmem:[#allocation6 + $0x3e0] sm:$0xff]
    %v1629 = vld [vmem:[#allocation6 + $0x3e8] sm:$0xff]
    %v1630 = vld [vmem:[#allocation6 + $0x3f0] sm:$0xff]
    %v1631 = vld [vmem:[#allocation6 + $0x3f8] sm:$0xff]
    %v1632 = vld [vmem:[%s9] sm:$0xff]
    %v1634 = vlaneseq
    %v1635 = vshrl.u32 %v1634, 7
    %v1636 = vsub.s32 0, %v1635
    %v1637 = vrot.slane %v1632, %v1636
    %v1638 = vlaneseq
    %v1639 = vshrl.u32 %v1638, 7
    %v1640 = vsub.s32 1, %v1639
    %v1641 = vrot.slane %v1632, %v1640
    %v1642 = vlaneseq
    %v1643 = vshrl.u32 %v1642, 7
    %v1644 = vsub.s32 2, %v1643
    %v1645 = vrot.slane %v1632, %v1644
    %v1646 = vlaneseq
    %v1647 = vshrl.u32 %v1646, 7
    %v1648 = vsub.s32 3, %v1647
    %v1649 = vrot.slane %v1632, %v1648
    %v1650 = vlaneseq
    %v1651 = vshrl.u32 %v1650, 7
    %v1652 = vsub.s32 4, %v1651
    %v1653 = vrot.slane %v1632, %v1652
    %v1654 = vlaneseq
    %v1655 = vshrl.u32 %v1654, 7
    %v1656 = vsub.s32 5, %v1655
    %v1657 = vrot.slane %v1632, %v1656
    %v1658 = vlaneseq
    %v1659 = vshrl.u32 %v1658, 7
    %v1660 = vsub.s32 6, %v1659
    %v1661 = vrot.slane %v1632, %v1660
    %v1662 = vlaneseq
    %v1663 = vshrl.u32 %v1662, 7
    %v1664 = vsub.s32 7, %v1663
    %v1665 = vrot.slane %v1632, %v1664
    %v1802 = vunpack.c.l.b16 %v1504
    %v1803 = vunpack.c.h.b16 %v1504
    %v1804 = vunpack.c.l.b16 %v1505
    %v1805 = vunpack.c.h.b16 %v1505
    %v1806 = vunpack.c.l.b16 %v1506
    %v1807 = vunpack.c.h.b16 %v1506
    %v1808 = vunpack.c.l.b16 %v1507
    %v1809 = vunpack.c.h.b16 %v1507
    %v1810 = vunpack.c.l.b16 %v1508
    %v1811 = vunpack.c.h.b16 %v1508
    %v1812 = vunpack.c.l.b16 %v1509
    %v1813 = vunpack.c.h.b16 %v1509
    %v1814 = vunpack.c.l.b16 %v1510
    %v1815 = vunpack.c.h.b16 %v1510
    %v1816 = vunpack.c.l.b16 %v1511
    %v1817 = vunpack.c.h.b16 %v1511
    %v1818 = vunpack.c.l.b16 %v1512
    %v1819 = vunpack.c.h.b16 %v1512
    %v1820 = vunpack.c.l.b16 %v1513
    %v1821 = vunpack.c.h.b16 %v1513
    %v1822 = vunpack.c.l.b16 %v1514
    %v1823 = vunpack.c.h.b16 %v1514
    %v1824 = vunpack.c.l.b16 %v1515
    %v1825 = vunpack.c.h.b16 %v1515
    %v1826 = vunpack.c.l.b16 %v1516
    %v1827 = vunpack.c.h.b16 %v1516
    %v1828 = vunpack.c.l.b16 %v1517
    %v1829 = vunpack.c.h.b16 %v1517
    %v1830 = vunpack.c.l.b16 %v1518
    %v1831 = vunpack.c.h.b16 %v1518
    %v1832 = vunpack.c.l.b16 %v1519
    %v1833 = vunpack.c.h.b16 %v1519
    %v1834 = vunpack.c.l.b16 %v1520
    %v1835 = vunpack.c.h.b16 %v1520
    %v1836 = vunpack.c.l.b16 %v1521
    %v1837 = vunpack.c.h.b16 %v1521
    %v1838 = vunpack.c.l.b16 %v1522
    %v1839 = vunpack.c.h.b16 %v1522
    %v1840 = vunpack.c.l.b16 %v1523
    %v1841 = vunpack.c.h.b16 %v1523
    %v1842 = vunpack.c.l.b16 %v1524
    %v1843 = vunpack.c.h.b16 %v1524
    %v1844 = vunpack.c.l.b16 %v1525
    %v1845 = vunpack.c.h.b16 %v1525
    %v1846 = vunpack.c.l.b16 %v1526
    %v1847 = vunpack.c.h.b16 %v1526
    %v1848 = vunpack.c.l.b16 %v1527
    %v1849 = vunpack.c.h.b16 %v1527
    %v1850 = vunpack.c.l.b16 %v1528
    %v1851 = vunpack.c.h.b16 %v1528
    %v1852 = vunpack.c.l.b16 %v1529
    %v1853 = vunpack.c.h.b16 %v1529
    %v1854 = vunpack.c.l.b16 %v1530
    %v1855 = vunpack.c.h.b16 %v1530
    %v1856 = vunpack.c.l.b16 %v1531
    %v1857 = vunpack.c.h.b16 %v1531
    %v1858 = vunpack.c.l.b16 %v1532
    %v1859 = vunpack.c.h.b16 %v1532
    %v1860 = vunpack.c.l.b16 %v1533
    %v1861 = vunpack.c.h.b16 %v1533
    %v1862 = vunpack.c.l.b16 %v1534
    %v1863 = vunpack.c.h.b16 %v1534
    %v1864 = vunpack.c.l.b16 %v1535
    %v1865 = vunpack.c.h.b16 %v1535
    %v1866 = vunpack.c.l.b16 %v1536
    %v1867 = vunpack.c.h.b16 %v1536
    %v1868 = vunpack.c.l.b16 %v1537
    %v1869 = vunpack.c.h.b16 %v1537
    %v1870 = vunpack.c.l.b16 %v1538
    %v1871 = vunpack.c.h.b16 %v1538
    %v1872 = vunpack.c.l.b16 %v1539
    %v1873 = vunpack.c.h.b16 %v1539
    %v1874 = vunpack.c.l.b16 %v1540
    %v1875 = vunpack.c.h.b16 %v1540
    %v1876 = vunpack.c.l.b16 %v1541
    %v1877 = vunpack.c.h.b16 %v1541
    %v1878 = vunpack.c.l.b16 %v1542
    %v1879 = vunpack.c.h.b16 %v1542
    %v1880 = vunpack.c.l.b16 %v1543
    %v1881 = vunpack.c.h.b16 %v1543
    %v1882 = vunpack.c.l.b16 %v1544
    %v1883 = vunpack.c.h.b16 %v1544
    %v1884 = vunpack.c.l.b16 %v1545
    %v1885 = vunpack.c.h.b16 %v1545
    %v1886 = vunpack.c.l.b16 %v1546
    %v1887 = vunpack.c.h.b16 %v1546
    %v1888 = vunpack.c.l.b16 %v1547
    %v1889 = vunpack.c.h.b16 %v1547
    %v1890 = vunpack.c.l.b16 %v1548
    %v1891 = vunpack.c.h.b16 %v1548
    %v1892 = vunpack.c.l.b16 %v1549
    %v1893 = vunpack.c.h.b16 %v1549
    %v1894 = vunpack.c.l.b16 %v1550
    %v1895 = vunpack.c.h.b16 %v1550
    %v1896 = vunpack.c.l.b16 %v1551
    %v1897 = vunpack.c.h.b16 %v1551
    %v1898 = vunpack.c.l.b16 %v1552
    %v1899 = vunpack.c.h.b16 %v1552
    %v1900 = vunpack.c.l.b16 %v1553
    %v1901 = vunpack.c.h.b16 %v1553
    %v1902 = vunpack.c.l.b16 %v1554
    %v1903 = vunpack.c.h.b16 %v1554
    %v1904 = vunpack.c.l.b16 %v1555
    %v1905 = vunpack.c.h.b16 %v1555
    %v1906 = vunpack.c.l.b16 %v1556
    %v1907 = vunpack.c.h.b16 %v1556
    %v1908 = vunpack.c.l.b16 %v1557
    %v1909 = vunpack.c.h.b16 %v1557
    %v1910 = vunpack.c.l.b16 %v1558
    %v1911 = vunpack.c.h.b16 %v1558
    %v1912 = vunpack.c.l.b16 %v1559
    %v1913 = vunpack.c.h.b16 %v1559
    %v1914 = vunpack.c.l.b16 %v1560
    %v1915 = vunpack.c.h.b16 %v1560
    %v1916 = vunpack.c.l.b16 %v1561
    %v1917 = vunpack.c.h.b16 %v1561
    %v1918 = vunpack.c.l.b16 %v1562
    %v1919 = vunpack.c.h.b16 %v1562
    %v1920 = vunpack.c.l.b16 %v1563
    %v1921 = vunpack.c.h.b16 %v1563
    %v1922 = vunpack.c.l.b16 %v1564
    %v1923 = vunpack.c.h.b16 %v1564
    %v1924 = vunpack.c.l.b16 %v1565
    %v1925 = vunpack.c.h.b16 %v1565
    %v1926 = vunpack.c.l.b16 %v1566
    %v1927 = vunpack.c.h.b16 %v1566
    %v1928 = vunpack.c.l.b16 %v1567
    %v1929 = vunpack.c.h.b16 %v1567
    %v1930 = vunpack.c.l.b16 %v1568
    %v1931 = vunpack.c.h.b16 %v1568
    %v1932 = vunpack.c.l.b16 %v1569
    %v1933 = vunpack.c.h.b16 %v1569
    %v1934 = vunpack.c.l.b16 %v1570
    %v1935 = vunpack.c.h.b16 %v1570
    %v1936 = vunpack.c.l.b16 %v1571
    %v1937 = vunpack.c.h.b16 %v1571
    %v1938 = vunpack.c.l.b16 %v1572
    %v1939 = vunpack.c.h.b16 %v1572
    %v1940 = vunpack.c.l.b16 %v1573
    %v1941 = vunpack.c.h.b16 %v1573
    %v1942 = vunpack.c.l.b16 %v1574
    %v1943 = vunpack.c.h.b16 %v1574
    %v1944 = vunpack.c.l.b16 %v1575
    %v1945 = vunpack.c.h.b16 %v1575
    %v1946 = vunpack.c.l.b16 %v1576
    %v1947 = vunpack.c.h.b16 %v1576
    %v1948 = vunpack.c.l.b16 %v1577
    %v1949 = vunpack.c.h.b16 %v1577
    %v1950 = vunpack.c.l.b16 %v1578
    %v1951 = vunpack.c.h.b16 %v1578
    %v1952 = vunpack.c.l.b16 %v1579
    %v1953 = vunpack.c.h.b16 %v1579
    %v1954 = vunpack.c.l.b16 %v1580
    %v1955 = vunpack.c.h.b16 %v1580
    %v1956 = vunpack.c.l.b16 %v1581
    %v1957 = vunpack.c.h.b16 %v1581
    %v1958 = vunpack.c.l.b16 %v1582
    %v1959 = vunpack.c.h.b16 %v1582
    %v1960 = vunpack.c.l.b16 %v1583
    %v1961 = vunpack.c.h.b16 %v1583
    %v1962 = vunpack.c.l.b16 %v1584
    %v1963 = vunpack.c.h.b16 %v1584
    %v1964 = vunpack.c.l.b16 %v1585
    %v1965 = vunpack.c.h.b16 %v1585
    %v1966 = vunpack.c.l.b16 %v1586
    %v1967 = vunpack.c.h.b16 %v1586
    %v1968 = vunpack.c.l.b16 %v1587
    %v1969 = vunpack.c.h.b16 %v1587
    %v1970 = vunpack.c.l.b16 %v1588
    %v1971 = vunpack.c.h.b16 %v1588
    %v1972 = vunpack.c.l.b16 %v1589
    %v1973 = vunpack.c.h.b16 %v1589
    %v1974 = vunpack.c.l.b16 %v1590
    %v1975 = vunpack.c.h.b16 %v1590
    %v1976 = vunpack.c.l.b16 %v1591
    %v1977 = vunpack.c.h.b16 %v1591
    %v1978 = vunpack.c.l.b16 %v1592
    %v1979 = vunpack.c.h.b16 %v1592
    %v1980 = vunpack.c.l.b16 %v1593
    %v1981 = vunpack.c.h.b16 %v1593
    %v1982 = vunpack.c.l.b16 %v1594
    %v1983 = vunpack.c.h.b16 %v1594
    %v1984 = vunpack.c.l.b16 %v1595
    %v1985 = vunpack.c.h.b16 %v1595
    %v1986 = vunpack.c.l.b16 %v1596
    %v1987 = vunpack.c.h.b16 %v1596
    %v1988 = vunpack.c.l.b16 %v1597
    %v1989 = vunpack.c.h.b16 %v1597
    %v1990 = vunpack.c.l.b16 %v1598
    %v1991 = vunpack.c.h.b16 %v1598
    %v1992 = vunpack.c.l.b16 %v1599
    %v1993 = vunpack.c.h.b16 %v1599
    %v1994 = vunpack.c.l.b16 %v1600
    %v1995 = vunpack.c.h.b16 %v1600
    %v1996 = vunpack.c.l.b16 %v1601
    %v1997 = vunpack.c.h.b16 %v1601
    %v1998 = vunpack.c.l.b16 %v1602
    %v1999 = vunpack.c.h.b16 %v1602
    %v2000 = vunpack.c.l.b16 %v1603
    %v2001 = vunpack.c.h.b16 %v1603
    %v2002 = vunpack.c.l.b16 %v1604
    %v2003 = vunpack.c.h.b16 %v1604
    %v2004 = vunpack.c.l.b16 %v1605
    %v2005 = vunpack.c.h.b16 %v1605
    %v2006 = vunpack.c.l.b16 %v1606
    %v2007 = vunpack.c.h.b16 %v1606
    %v2008 = vunpack.c.l.b16 %v1607
    %v2009 = vunpack.c.h.b16 %v1607
    %v2010 = vunpack.c.l.b16 %v1608
    %v2011 = vunpack.c.h.b16 %v1608
    %v2012 = vunpack.c.l.b16 %v1609
    %v2013 = vunpack.c.h.b16 %v1609
    %v2014 = vunpack.c.l.b16 %v1610
    %v2015 = vunpack.c.h.b16 %v1610
    %v2016 = vunpack.c.l.b16 %v1611
    %v2017 = vunpack.c.h.b16 %v1611
    %v2018 = vunpack.c.l.b16 %v1612
    %v2019 = vunpack.c.h.b16 %v1612
    %v2020 = vunpack.c.l.b16 %v1613
    %v2021 = vunpack.c.h.b16 %v1613
    %v2022 = vunpack.c.l.b16 %v1614
    %v2023 = vunpack.c.h.b16 %v1614
    %v2024 = vunpack.c.l.b16 %v1615
    %v2025 = vunpack.c.h.b16 %v1615
    %v2026 = vunpack.c.l.b16 %v1616
    %v2027 = vunpack.c.h.b16 %v1616
    %v2028 = vunpack.c.l.b16 %v1617
    %v2029 = vunpack.c.h.b16 %v1617
    %v2030 = vunpack.c.l.b16 %v1618
    %v2031 = vunpack.c.h.b16 %v1618
    %v2032 = vunpack.c.l.b16 %v1619
    %v2033 = vunpack.c.h.b16 %v1619
    %v2034 = vunpack.c.l.b16 %v1620
    %v2035 = vunpack.c.h.b16 %v1620
    %v2036 = vunpack.c.l.b16 %v1621
    %v2037 = vunpack.c.h.b16 %v1621
    %v2038 = vunpack.c.l.b16 %v1622
    %v2039 = vunpack.c.h.b16 %v1622
    %v2040 = vunpack.c.l.b16 %v1623
    %v2041 = vunpack.c.h.b16 %v1623
    %v2042 = vunpack.c.l.b16 %v1624
    %v2043 = vunpack.c.h.b16 %v1624
    %v2044 = vunpack.c.l.b16 %v1625
    %v2045 = vunpack.c.h.b16 %v1625
    %v2046 = vunpack.c.l.b16 %v1626
    %v2047 = vunpack.c.h.b16 %v1626
    %v2048 = vunpack.c.l.b16 %v1627
    %v2049 = vunpack.c.h.b16 %v1627
    %v2050 = vunpack.c.l.b16 %v1628
    %v2051 = vunpack.c.h.b16 %v1628
    %v2052 = vunpack.c.l.b16 %v1629
    %v2053 = vunpack.c.h.b16 %v1629
    %v2054 = vunpack.c.l.b16 %v1630
    %v2055 = vunpack.c.h.b16 %v1630
    %v2056 = vunpack.c.l.b16 %v1631
    %v2057 = vunpack.c.h.b16 %v1631
    %v2058 = vpack.c.b16 %v1810, %v1802
    %v2059 = vpack.c.b16 %v1811, %v1803
    %v2060 = vpack.c.b16 %v1812, %v1804
    %v2061 = vpack.c.b16 %v1813, %v1805
    %v2062 = vpack.c.b16 %v1814, %v1806
    %v2063 = vpack.c.b16 %v1815, %v1807
    %v2064 = vpack.c.b16 %v1816, %v1808
    %v2065 = vpack.c.b16 %v1817, %v1809
    %v2066 = vpack.c.b16 %v1826, %v1818
    %v2067 = vpack.c.b16 %v1827, %v1819
    %v2068 = vpack.c.b16 %v1828, %v1820
    %v2069 = vpack.c.b16 %v1829, %v1821
    %v2070 = vpack.c.b16 %v1830, %v1822
    %v2071 = vpack.c.b16 %v1831, %v1823
    %v2072 = vpack.c.b16 %v1832, %v1824
    %v2073 = vpack.c.b16 %v1833, %v1825
    %v2074 = vpack.c.b16 %v1842, %v1834
    %v2075 = vpack.c.b16 %v1843, %v1835
    %v2076 = vpack.c.b16 %v1844, %v1836
    %v2077 = vpack.c.b16 %v1845, %v1837
    %v2078 = vpack.c.b16 %v1846, %v1838
    %v2079 = vpack.c.b16 %v1847, %v1839
    %v2080 = vpack.c.b16 %v1848, %v1840
    %v2081 = vpack.c.b16 %v1849, %v1841
    %v2082 = vpack.c.b16 %v1858, %v1850
    %v2083 = vpack.c.b16 %v1859, %v1851
    %v2084 = vpack.c.b16 %v1860, %v1852
    %v2085 = vpack.c.b16 %v1861, %v1853
    %v2086 = vpack.c.b16 %v1862, %v1854
    %v2087 = vpack.c.b16 %v1863, %v1855
    %v2088 = vpack.c.b16 %v1864, %v1856
    %v2089 = vpack.c.b16 %v1865, %v1857
    %v2090 = vpack.c.b16 %v1874, %v1866
    %v2091 = vpack.c.b16 %v1875, %v1867
    %v2092 = vpack.c.b16 %v1876, %v1868
    %v2093 = vpack.c.b16 %v1877, %v1869
    %v2094 = vpack.c.b16 %v1878, %v1870
    %v2095 = vpack.c.b16 %v1879, %v1871
    %v2096 = vpack.c.b16 %v1880, %v1872
    %v2097 = vpack.c.b16 %v1881, %v1873
    %v2098 = vpack.c.b16 %v1890, %v1882
    %v2099 = vpack.c.b16 %v1891, %v1883
    %v2100 = vpack.c.b16 %v1892, %v1884
    %v2101 = vpack.c.b16 %v1893, %v1885
    %v2102 = vpack.c.b16 %v1894, %v1886
    %v2103 = vpack.c.b16 %v1895, %v1887
    %v2104 = vpack.c.b16 %v1896, %v1888
    %v2105 = vpack.c.b16 %v1897, %v1889
    %v2106 = vpack.c.b16 %v1906, %v1898
    %v2107 = vpack.c.b16 %v1907, %v1899
    %v2108 = vpack.c.b16 %v1908, %v1900
    %v2109 = vpack.c.b16 %v1909, %v1901
    %v2110 = vpack.c.b16 %v1910, %v1902
    %v2111 = vpack.c.b16 %v1911, %v1903
    %v2112 = vpack.c.b16 %v1912, %v1904
    %v2113 = vpack.c.b16 %v1913, %v1905
    %v2114 = vpack.c.b16 %v1922, %v1914
    %v2115 = vpack.c.b16 %v1923, %v1915
    %v2116 = vpack.c.b16 %v1924, %v1916
    %v2117 = vpack.c.b16 %v1925, %v1917
    %v2118 = vpack.c.b16 %v1926, %v1918
    %v2119 = vpack.c.b16 %v1927, %v1919
    %v2120 = vpack.c.b16 %v1928, %v1920
    %v2121 = vpack.c.b16 %v1929, %v1921
    %v2122 = vpack.c.b16 %v1938, %v1930
    %v2123 = vpack.c.b16 %v1939, %v1931
    %v2124 = vpack.c.b16 %v1940, %v1932
    %v2125 = vpack.c.b16 %v1941, %v1933
    %v2126 = vpack.c.b16 %v1942, %v1934
    %v2127 = vpack.c.b16 %v1943, %v1935
    %v2128 = vpack.c.b16 %v1944, %v1936
    %v2129 = vpack.c.b16 %v1945, %v1937
    %v2130 = vpack.c.b16 %v1954, %v1946
    %v2131 = vpack.c.b16 %v1955, %v1947
    %v2132 = vpack.c.b16 %v1956, %v1948
    %v2133 = vpack.c.b16 %v1957, %v1949
    %v2134 = vpack.c.b16 %v1958, %v1950
    %v2135 = vpack.c.b16 %v1959, %v1951
    %v2136 = vpack.c.b16 %v1960, %v1952
    %v2137 = vpack.c.b16 %v1961, %v1953
    %v2138 = vpack.c.b16 %v1970, %v1962
    %v2139 = vpack.c.b16 %v1971, %v1963
    %v2140 = vpack.c.b16 %v1972, %v1964
    %v2141 = vpack.c.b16 %v1973, %v1965
    %v2142 = vpack.c.b16 %v1974, %v1966
    %v2143 = vpack.c.b16 %v1975, %v1967
    %v2144 = vpack.c.b16 %v1976, %v1968
    %v2145 = vpack.c.b16 %v1977, %v1969
    %v2146 = vpack.c.b16 %v1986, %v1978
    %v2147 = vpack.c.b16 %v1987, %v1979
    %v2148 = vpack.c.b16 %v1988, %v1980
    %v2149 = vpack.c.b16 %v1989, %v1981
    %v2150 = vpack.c.b16 %v1990, %v1982
    %v2151 = vpack.c.b16 %v1991, %v1983
    %v2152 = vpack.c.b16 %v1992, %v1984
    %v2153 = vpack.c.b16 %v1993, %v1985
    %v2154 = vpack.c.b16 %v2002, %v1994
    %v2155 = vpack.c.b16 %v2003, %v1995
    %v2156 = vpack.c.b16 %v2004, %v1996
    %v2157 = vpack.c.b16 %v2005, %v1997
    %v2158 = vpack.c.b16 %v2006, %v1998
    %v2159 = vpack.c.b16 %v2007, %v1999
    %v2160 = vpack.c.b16 %v2008, %v2000
    %v2161 = vpack.c.b16 %v2009, %v2001
    %v2162 = vpack.c.b16 %v2018, %v2010
    %v2163 = vpack.c.b16 %v2019, %v2011
    %v2164 = vpack.c.b16 %v2020, %v2012
    %v2165 = vpack.c.b16 %v2021, %v2013
    %v2166 = vpack.c.b16 %v2022, %v2014
    %v2167 = vpack.c.b16 %v2023, %v2015
    %v2168 = vpack.c.b16 %v2024, %v2016
    %v2169 = vpack.c.b16 %v2025, %v2017
    %v2170 = vpack.c.b16 %v2034, %v2026
    %v2171 = vpack.c.b16 %v2035, %v2027
    %v2172 = vpack.c.b16 %v2036, %v2028
    %v2173 = vpack.c.b16 %v2037, %v2029
    %v2174 = vpack.c.b16 %v2038, %v2030
    %v2175 = vpack.c.b16 %v2039, %v2031
    %v2176 = vpack.c.b16 %v2040, %v2032
    %v2177 = vpack.c.b16 %v2041, %v2033
    %v2178 = vpack.c.b16 %v2050, %v2042
    %v2179 = vpack.c.b16 %v2051, %v2043
    %v2180 = vpack.c.b16 %v2052, %v2044
    %v2181 = vpack.c.b16 %v2053, %v2045
    %v2182 = vpack.c.b16 %v2054, %v2046
    %v2183 = vpack.c.b16 %v2055, %v2047
    %v2184 = vpack.c.b16 %v2056, %v2048
    %v2185 = vpack.c.b16 %v2057, %v2049
    %2314 = vmatprep.subr.bf16.mxu0 %v2059
    %2315 = vmatpush1.bf16.msra.mxu0 %v2058
    %2316 = vmatprep.subr.bf16.mxu0 %v2067
    %2317 = vmatpush1.bf16.msra.mxu0 %v2066
    %2318 = vmatprep.subr.bf16.mxu0 %v2075
    %2319 = vmatpush1.bf16.msra.mxu0 %v2074
    %2320 = vmatprep.subr.bf16.mxu0 %v2083
    %2321 = vmatpush1.bf16.msra.mxu0 %v2082
    %2322 = vmatprep.subr.bf16.mxu0 %v2091
    %2323 = vmatpush1.bf16.msra.mxu0 %v2090
    %2324 = vmatprep.subr.bf16.mxu0 %v2099
    %2325 = vmatpush1.bf16.msra.mxu0 %v2098
    %2326 = vmatprep.subr.bf16.mxu0 %v2107
    %2327 = vmatpush1.bf16.msra.mxu0 %v2106
    %2328 = vmatprep.subr.bf16.mxu0 %v2115
    %2329 = vmatpush1.bf16.msra.mxu0 %v2114
    %2330 = vmatprep.subr.bf16.mxu0 %v2123
    %2331 = vmatpush1.bf16.msra.mxu0 %v2122
    %2332 = vmatprep.subr.bf16.mxu0 %v2131
    %2333 = vmatpush1.bf16.msra.mxu0 %v2130
    %2334 = vmatprep.subr.bf16.mxu0 %v2139
    %2335 = vmatpush1.bf16.msra.mxu0 %v2138
    %2336 = vmatprep.subr.bf16.mxu0 %v2147
    %2337 = vmatpush1.bf16.msra.mxu0 %v2146
    %2338 = vmatprep.subr.bf16.mxu0 %v2155
    %2339 = vmatpush1.bf16.msra.mxu0 %v2154
    %2340 = vmatprep.subr.bf16.mxu0 %v2163
    %2341 = vmatpush1.bf16.msra.mxu0 %v2162
    %2342 = vmatprep.subr.bf16.mxu0 %v2171
    %2343 = vmatpush1.bf16.msra.mxu0 %v2170
    %2344 = vmatprep.subr.bf16.mxu0 %v2179
    %2345 = vmatpush1.bf16.msra.mxu0 %v2178
    %2346 = vmatprep.mubr.bf16.mxu0 %v1503
    %2347 = vmatmul.mubr.bf16.gmra.mrb[0].mxu0 %v1502
    %v2348 = vpop.f32.mrb[0].mxu0
    %v2349 = vadd.f32 %v1637, %v2348
    %v2350 = vpop.f32.mrb[0].mxu0
    %v2351 = vadd.f32 %v1641, %v2350
    %v2352 = vpop.f32.mrb[0].mxu0
    %v2353 = vadd.f32 %v1637, %v2352
    %v2354 = vpop.f32.mrb[0].mxu0
    %v2355 = vadd.f32 %v1641, %v2354
    %2356 = vdwg.mxu0
    %2357 = vmatprep.subr.bf16.mxu0 %v2061
    %2358 = vmatpush1.bf16.msra.mxu0 %v2060
    %2359 = vmatprep.subr.bf16.mxu0 %v2069
    %2360 = vmatpush1.bf16.msra.mxu0 %v2068
    %2361 = vmatprep.subr.bf16.mxu0 %v2077
    %2362 = vmatpush1.bf16.msra.mxu0 %v2076
    %2363 = vmatprep.subr.bf16.mxu0 %v2085
    %2364 = vmatpush1.bf16.msra.mxu0 %v2084
    %2365 = vmatprep.subr.bf16.mxu0 %v2093
    %2366 = vmatpush1.bf16.msra.mxu0 %v2092
    %2367 = vmatprep.subr.bf16.mxu0 %v2101
    %2368 = vmatpush1.bf16.msra.mxu0 %v2100
    %2369 = vmatprep.subr.bf16.mxu0 %v2109
    %2370 = vmatpush1.bf16.msra.mxu0 %v2108
    %2371 = vmatprep.subr.bf16.mxu0 %v2117
    %2372 = vmatpush1.bf16.msra.mxu0 %v2116
    %2373 = vmatprep.subr.bf16.mxu0 %v2125
    %2374 = vmatpush1.bf16.msra.mxu0 %v2124
    %2375 = vmatprep.subr.bf16.mxu0 %v2133
    %2376 = vmatpush1.bf16.msra.mxu0 %v2132
    %2377 = vmatprep.subr.bf16.mxu0 %v2141
    %2378 = vmatpush1.bf16.msra.mxu0 %v2140
    %2379 = vmatprep.subr.bf16.mxu0 %v2149
    %2380 = vmatpush1.bf16.msra.mxu0 %v2148
    %2381 = vmatprep.subr.bf16.mxu0 %v2157
    %2382 = vmatpush1.bf16.msra.mxu0 %v2156
    %2383 = vmatprep.subr.bf16.mxu0 %v2165
    %2384 = vmatpush1.bf16.msra.mxu0 %v2164
    %2385 = vmatprep.subr.bf16.mxu0 %v2173
    %2386 = vmatpush1.bf16.msra.mxu0 %v2172
    %2387 = vmatprep.subr.bf16.mxu0 %v2181
    %2388 = vmatpush1.bf16.msra.mxu0 %v2180
    %2389 = vmatprep.mubr.bf16.mxu0 %v1503
    %2390 = vmatmul.mubr.bf16.gmra.mrb[0].mxu0 %v1502
    %v2391 = vpop.f32.mrb[0].mxu0
    %v2392 = vadd.f32 %v1645, %v2391
    %v2393 = vpop.f32.mrb[0].mxu0
    %v2394 = vadd.f32 %v1649, %v2393
    %v2395 = vpop.f32.mrb[0].mxu0
    %v2396 = vadd.f32 %v1645, %v2395
    %v2397 = vpop.f32.mrb[0].mxu0
    %v2398 = vadd.f32 %v1649, %v2397
    %2399 = vdwg.mxu0
    %2400 = vmatprep.subr.bf16.mxu0 %v2063
    %2401 = vmatpush1.bf16.msra.mxu0 %v2062
    %2402 = vmatprep.subr.bf16.mxu0 %v2071
    %2403 = vmatpush1.bf16.msra.mxu0 %v2070
    %2404 = vmatprep.subr.bf16.mxu0 %v2079
    %2405 = vmatpush1.bf16.msra.mxu0 %v2078
    %2406 = vmatprep.subr.bf16.mxu0 %v2087
    %2407 = vmatpush1.bf16.msra.mxu0 %v2086
    %2408 = vmatprep.subr.bf16.mxu0 %v2095
    %2409 = vmatpush1.bf16.msra.mxu0 %v2094
    %2410 = vmatprep.subr.bf16.mxu0 %v2103
    %2411 = vmatpush1.bf16.msra.mxu0 %v2102
    %2412 = vmatprep.subr.bf16.mxu0 %v2111
    %2413 = vmatpush1.bf16.msra.mxu0 %v2110
    %2414 = vmatprep.subr.bf16.mxu0 %v2119
    %2415 = vmatpush1.bf16.msra.mxu0 %v2118
    %2416 = vmatprep.subr.bf16.mxu0 %v2127
    %2417 = vmatpush1.bf16.msra.mxu0 %v2126
    %2418 = vmatprep.subr.bf16.mxu0 %v2135
    %2419 = vmatpush1.bf16.msra.mxu0 %v2134
    %2420 = vmatprep.subr.bf16.mxu0 %v2143
    %2421 = vmatpush1.bf16.msra.mxu0 %v2142
    %2422 = vmatprep.subr.bf16.mxu0 %v2151
    %2423 = vmatpush1.bf16.msra.mxu0 %v2150
    %2424 = vmatprep.subr.bf16.mxu0 %v2159
    %2425 = vmatpush1.bf16.msra.mxu0 %v2158
    %2426 = vmatprep.subr.bf16.mxu0 %v2167
    %2427 = vmatpush1.bf16.msra.mxu0 %v2166
    %2428 = vmatprep.subr.bf16.mxu0 %v2175
    %2429 = vmatpush1.bf16.msra.mxu0 %v2174
    %2430 = vmatprep.subr.bf16.mxu0 %v2183
    %2431 = vmatpush1.bf16.msra.mxu0 %v2182
    %2432 = vmatprep.mubr.bf16.mxu0 %v1503
    %2433 = vmatmul.mubr.bf16.gmra.mrb[0].mxu0 %v1502
    %v2434 = vpop.f32.mrb[0].mxu0
    %v2435 = vadd.f32 %v1653, %v2434
    %v2436 = vpop.f32.mrb[0].mxu0
    %v2437 = vadd.f32 %v1657, %v2436
    %v2438 = vpop.f32.mrb[0].mxu0
    %v2439 = vadd.f32 %v1653, %v2438
    %v2440 = vpop.f32.mrb[0].mxu0
    %v2441 = vadd.f32 %v1657, %v2440
    %2442 = vdwg.mxu0
    %2443 = vmatprep.subr.bf16.mxu0 %v2065
    %2444 = vmatpush1.bf16.msra.mxu0 %v2064
    %2445 = vmatprep.subr.bf16.mxu0 %v2073
    %2446 = vmatpush1.bf16.msra.mxu0 %v2072
    %2447 = vmatprep.subr.bf16.mxu0 %v2081
    %2448 = vmatpush1.bf16.msra.mxu0 %v2080
    %2449 = vmatprep.subr.bf16.mxu0 %v2089
    %2450 = vmatpush1.bf16.msra.mxu0 %v2088
    %2451 = vmatprep.subr.bf16.mxu0 %v2097
    %2452 = vmatpush1.bf16.msra.mxu0 %v2096
    %2453 = vmatprep.subr.bf16.mxu0 %v2105
    %2454 = vmatpush1.bf16.msra.mxu0 %v2104
    %2455 = vmatprep.subr.bf16.mxu0 %v2113
    %2456 = vmatpush1.bf16.msra.mxu0 %v2112
    %2457 = vmatprep.subr.bf16.mxu0 %v2121
    %2458 = vmatpush1.bf16.msra.mxu0 %v2120
    %2459 = vmatprep.subr.bf16.mxu0 %v2129
    %2460 = vmatpush1.bf16.msra.mxu0 %v2128
    %2461 = vmatprep.subr.bf16.mxu0 %v2137
    %2462 = vmatpush1.bf16.msra.mxu0 %v2136
    %2463 = vmatprep.subr.bf16.mxu0 %v2145
    %2464 = vmatpush1.bf16.msra.mxu0 %v2144
    %2465 = vmatprep.subr.bf16.mxu0 %v2153
    %2466 = vmatpush1.bf16.msra.mxu0 %v2152
    %2467 = vmatprep.subr.bf16.mxu0 %v2161
    %2468 = vmatpush1.bf16.msra.mxu0 %v2160
    %2469 = vmatprep.subr.bf16.mxu0 %v2169
    %2470 = vmatpush1.bf16.msra.mxu0 %v2168
    %2471 = vmatprep.subr.bf16.mxu0 %v2177
    %2472 = vmatpush1.bf16.msra.mxu0 %v2176
    %2473 = vmatprep.subr.bf16.mxu0 %v2185
    %2474 = vmatpush1.bf16.msra.mxu0 %v2184
    %2475 = vmatprep.mubr.bf16.mxu0 %v1503
    %2476 = vmatmul.mubr.bf16.gmra.mrb[0].mxu0 %v1502
    %v2477 = vpop.f32.mrb[0].mxu0
    %v2478 = vadd.f32 %v1661, %v2477
    %v2479 = vpop.f32.mrb[0].mxu0
    %v2480 = vadd.f32 %v1665, %v2479
    %v2481 = vpop.f32.mrb[0].mxu0
    %v2482 = vadd.f32 %v1661, %v2481
    %v2483 = vpop.f32.mrb[0].mxu0
    %v2484 = vadd.f32 %v1665, %v2483
    %2485 = vdwg.mxu0
    %v2486 = vxor.u32 %v2349, 2147483648
    %v2487 = vxor.u32 %v2351, 2147483648
    %v2488 = vxor.u32 %v2392, 2147483648
    %v2489 = vxor.u32 %v2394, 2147483648
    %v2490 = vxor.u32 %v2435, 2147483648
    %v2491 = vxor.u32 %v2437, 2147483648
    %v2492 = vxor.u32 %v2478, 2147483648
    %v2493 = vxor.u32 %v2480, 2147483648
    %v2494 = vxor.u32 %v2353, 2147483648
    %v2495 = vxor.u32 %v2355, 2147483648
    %v2496 = vxor.u32 %v2396, 2147483648
    %v2497 = vxor.u32 %v2398, 2147483648
    %v2498 = vxor.u32 %v2439, 2147483648
    %v2499 = vxor.u32 %v2441, 2147483648
    %v2500 = vxor.u32 %v2482, 2147483648
    %v2501 = vxor.u32 %v2484, 2147483648
    %v2502 = vmul.f32 %v2486, 1.442695
    %v2503 = vpow.pop %v2502
    %v2504 = vmul.f32 %v2487, 1.442695
    %v2505 = vpow.pop %v2504
    %v2506 = vmul.f32 %v2488, 1.442695
    %v2507 = vpow.pop %v2506
    %v2508 = vmul.f32 %v2489, 1.442695
    %v2509 = vpow.pop %v2508
    %v2510 = vmul.f32 %v2490, 1.442695
    %v2511 = vpow.pop %v2510
    %v2512 = vmul.f32 %v2491, 1.442695
    %v2513 = vpow.pop %v2512
    %v2514 = vmul.f32 %v2492, 1.442695
    %v2515 = vpow.pop %v2514
    %v2516 = vmul.f32 %v2493, 1.442695
    %v2517 = vpow.pop %v2516
    %v2518 = vmul.f32 %v2494, 1.442695
    %v2519 = vpow.pop %v2518
    %v2520 = vmul.f32 %v2495, 1.442695
    %v2521 = vpow.pop %v2520
    %v2522 = vmul.f32 %v2496, 1.442695
    %v2523 = vpow.pop %v2522
    %v2524 = vmul.f32 %v2497, 1.442695
    %v2525 = vpow.pop %v2524
    %v2526 = vmul.f32 %v2498, 1.442695
    %v2527 = vpow.pop %v2526
    %v2528 = vmul.f32 %v2499, 1.442695
    %v2529 = vpow.pop %v2528
    %v2530 = vmul.f32 %v2500, 1.442695
    %v2531 = vpow.pop %v2530
    %v2532 = vmul.f32 %v2501, 1.442695
    %v2533 = vpow.pop %v2532
    %v2534 = vadd.f32 %v2503, 1.0
    %v2535 = vadd.f32 %v2505, 1.0
    %v2536 = vadd.f32 %v2507, 1.0
    %v2537 = vadd.f32 %v2509, 1.0
    %v2538 = vadd.f32 %v2511, 1.0
    %v2539 = vadd.f32 %v2513, 1.0
    %v2540 = vadd.f32 %v2515, 1.0
    %v2541 = vadd.f32 %v2517, 1.0
    %v2542 = vadd.f32 %v2519, 1.0
    %v2543 = vadd.f32 %v2521, 1.0
    %v2544 = vadd.f32 %v2523, 1.0
    %v2545 = vadd.f32 %v2525, 1.0
    %v2546 = vadd.f32 %v2527, 1.0
    %v2547 = vadd.f32 %v2529, 1.0
    %v2548 = vadd.f32 %v2531, 1.0
    %v2549 = vadd.f32 %v2533, 1.0
    %v2550 = vrcp.pop %v2534
    %v2551 = vmul.f32 1.0, %v2550
    %v2552 = vrcp.pop %v2535
    %v2553 = vmul.f32 1.0, %v2552
    %v2554 = vrcp.pop %v2536
    %v2555 = vmul.f32 1.0, %v2554
    %v2556 = vrcp.pop %v2537
    %v2557 = vmul.f32 1.0, %v2556
    %v2558 = vrcp.pop %v2538
    %v2559 = vmul.f32 1.0, %v2558
    %v2560 = vrcp.pop %v2539
    %v2561 = vmul.f32 1.0, %v2560
    %v2562 = vrcp.pop %v2540
    %v2563 = vmul.f32 1.0, %v2562
    %v2564 = vrcp.pop %v2541
    %v2565 = vmul.f32 1.0, %v2564
    %v2566 = vrcp.pop %v2542
    %v2567 = vmul.f32 1.0, %v2566
    %v2568 = vrcp.pop %v2543
    %v2569 = vmul.f32 1.0, %v2568
    %v2570 = vrcp.pop %v2544
    %v2571 = vmul.f32 1.0, %v2570
    %v2572 = vrcp.pop %v2545
    %v2573 = vmul.f32 1.0, %v2572
    %v2574 = vrcp.pop %v2546
    %v2575 = vmul.f32 1.0, %v2574
    %v2576 = vrcp.pop %v2547
    %v2577 = vmul.f32 1.0, %v2576
    %v2578 = vrcp.pop %v2548
    %v2579 = vmul.f32 1.0, %v2578
    %v2580 = vrcp.pop %v2549
    %v2581 = vmul.f32 1.0, %v2580
    %v2582 = vpack.c.bf16 %v2567, %v2551
    %v2583 = vpack.c.bf16 %v2569, %v2553
    %v2584 = vpack.c.bf16 %v2571, %v2555
    %v2585 = vpack.c.bf16 %v2573, %v2557
    %v2586 = vpack.c.bf16 %v2575, %v2559
    %v2587 = vpack.c.bf16 %v2577, %v2561
    %v2588 = vpack.c.bf16 %v2579, %v2563
    %v2589 = vpack.c.bf16 %v2581, %v2565
    %v2598 = vunpack.c.l.b16 %v2582
    %v2599 = vunpack.c.l.b16 %v2583
    %v2600 = vunpack.c.l.b16 %v2584
    %v2601 = vunpack.c.l.b16 %v2585
    %v2602 = vunpack.c.l.b16 %v2586
    %v2603 = vunpack.c.l.b16 %v2587
    %v2604 = vunpack.c.l.b16 %v2588
    %v2605 = vunpack.c.l.b16 %v2589
    %v2606 = vunpack.c.h.b16 %v2582
    %v2607 = vunpack.c.h.b16 %v2583
    %v2608 = vunpack.c.h.b16 %v2584
    %v2609 = vunpack.c.h.b16 %v2585
    %v2610 = vunpack.c.h.b16 %v2586
    %v2611 = vunpack.c.h.b16 %v2587
    %v2612 = vunpack.c.h.b16 %v2588
    %v2613 = vunpack.c.h.b16 %v2589
    %v2614 = vpack.c.b16 %v2599, %v2598
    %v2615 = vpack.c.b16 %v2601, %v2600
    %v2616 = vpack.c.b16 %v2603, %v2602
    %v2617 = vpack.c.b16 %v2605, %v2604
    %v2618 = vpack.c.b16 %v2607, %v2606
    %v2619 = vpack.c.b16 %v2609, %v2608
    %v2620 = vpack.c.b16 %v2611, %v2610
    %v2621 = vpack.c.b16 %v2613, %v2612
    %2630 = vst [vmem:[%s11] sm:$0xff] %v2614
    %2631 = vst [vmem:[%s11 + $0x8] sm:$0xff] %v2615
    %2632 = vst [vmem:[%s11 + $0x10] sm:$0xff] %v2616
    %2633 = vst [vmem:[%s11 + $0x18] sm:$0xff] %v2617
    %2634 = vst [vmem:[%s11 + $0x20] sm:$0xff] %v2618
    %2635 = vst [vmem:[%s11 + $0x28] sm:$0xff] %v2619
    %2636 = vst [vmem:[%s11 + $0x30] sm:$0xff] %v2620
    %2637 = vst [vmem:[%s11 + $0x38] sm:$0xff] %v2621
    // Predicated region
    $region54: #{vae_forward.1} parent=1 // pred_check
      _
    $region55: #{vae_forward.1} parent=1 // pred_check_branch
      %2639 = sbr.rel (0) target = $region57
    $region56: #{vae_forward.1} parent=1 // pred_region
      _
    $region57: #{vae_forward.1} parent=1 // pred_fallthru
      _
    // Predicated region
    $region58: #{vae_forward.1} parent=1 // pred_check
      _
    $region59: #{vae_forward.1} parent=1 // pred_check_branch
      %2641 = sbr.rel (0) target = $region61
    $region60: #{vae_forward.1} parent=1 // pred_region
      _
    $region61: #{vae_forward.1} parent=1 // pred_fallthru
      _
    // Predicated region
    $region62: #{vae_forward.1} parent=1 // pred_check
      _
    $region63: #{vae_forward.1} parent=1 // pred_check_branch
      %2643 = sbr.rel (0) target = $region65
    $region64: #{vae_forward.1} parent=1 // pred_region
      _
    $region65: #{vae_forward.1} parent=1 // pred_fallthru
      _
    // Predicated region
    $region66: #{vae_forward.1} parent=1 // pred_check
      _
    $region67: #{vae_forward.1} parent=1 // pred_check_branch
      %2645 = sbr.rel (0) target = $region69
    $region68: #{vae_forward.1} parent=1 // pred_region
      _
    $region69: #{vae_forward.1} parent=1 // pred_fallthru
      _
    %2646 = vsyncpa [#allocation3], 1
    %2647 = vsyncpa [#allocation5], 1

</llo_original>
